<compile_context>
chip_gen: v7x
topology: tpu7x:2x2x1
jax: 0.10.0
libtpu: 0.0.40
codegen_flags: <defaults>
</compile_context>

<pallas_src>
import functools
import math

import numpy as np
import jax
import jax.numpy as jnp
from jax.experimental import pallas as pl
from jax.experimental.pallas import tpu as pltpu


_SUB = 8  # sublane tile: batch rows padded to a multiple of 8


# ----------------------------------------------------------------------------
# Deterministic parameter setup (mirrors init_kernels(..., invers=True))
# ----------------------------------------------------------------------------
def _periodic_hamming(win_len):
    # scipy.signal.get_window('hamming', win_len, fftbins=True)
    n = np.arange(win_len)
    return 0.54 - 0.46 * np.cos(2.0 * np.pi * n / win_len)


def init_kernels(win_len, fft_len, win_type="hamming"):
    if win_type is None or win_type == "None":
        window = np.ones(win_len)
    else:
        window = _periodic_hamming(win_len)
    N = fft_len
    fourier_basis = np.fft.rfft(np.eye(N))[:win_len]          # [win_len, N//2+1]
    real_kernel = np.real(fourier_basis)
    imag_kernel = np.imag(fourier_basis)
    kernel = np.concatenate([real_kernel, imag_kernel], 1).T  # [N+2, win_len]
    kernel = np.linalg.pinv(kernel).T                         # invers=True
    kernel = kernel * window                                  # [N+2, win_len]
    return kernel.astype(np.float32), window.astype(np.float32)


def _round_up(x, m):
    return (x + m - 1) // m * m


def _build_inv_coff(window, T, stride, total_len):
    """1 / (overlap-added window^2 + 1e-8) over [0, total_len) -> [1, total_len]."""
    K = window.shape[0]
    L = (T - 1) * stride + K
    wsq = window.astype(np.float64) ** 2
    coff = np.zeros((max(total_len, L),), np.float64)
    for t in range(T):
        coff[t * stride:t * stride + K] += wsq
    inv = (1.0 / (coff + 1e-8)).astype(np.float32)
    out = np.zeros((1, total_len), np.float32)
    n = min(total_len, L)
    out[0, :n] = inv[:n]
    return out


# ----------------------------------------------------------------------------
# Pallas kernel: per-block matmul + sliding-window overlap-add + streaming out
# ----------------------------------------------------------------------------
def _istft_stream_kernel(x_ref, w_ref, inv_ref, o_ref, frames_ref, acc_ref, *,
                         stride, k_pad, tb):
    # x_ref:      [1, tb*8, c_pad]        frame block (frame-major, batch-minor)
    # w_ref:      [c_pad, k_pad]          synthesis weights (constant index)
    # inv_ref:    [1, tb*stride]          reciprocal overlap normalizer chunk
    # o_ref:      [1, 8, tb*stride]       streamed output chunk
    # frames_ref: [tb*8, k_pad]   (VMEM)  MXU result staging
    # acc_ref:    [8, tb*stride + k_pad]  sliding overlap-add window + carry
    i = pl.program_id(1)
    out_w = tb * stride
    rows = acc_ref.shape[0]

    @pl.when(i == 0)
    def _init():
        acc_ref[...] = jnp.zeros_like(acc_ref)

    # MXU: all tb frames x 8 batch rows in one matmul; stage in VMEM so vreg
    # pressure stays bounded regardless of tb.
    frames_ref[...] = jnp.dot(x_ref[0], w_ref[...],
                              preferred_element_type=jnp.float32)

    # Overlap-add at static offsets into the sliding window (static unroll).
    # NOTE: a pltpu.roll-based pre-combine of the 128//stride frames sharing a
    # 128-lane period would further cut acc load/store traffic (v5e's single
    # vst slot); omitted to keep the lowering simple and portable.
    for j in range(tb):
        s = j * stride
        acc_ref[:, s:s + k_pad] = (
            acc_ref[:, s:s + k_pad] + frames_ref[j * _SUB:(j + 1) * _SUB, :])

    # Emit this window's finished samples, normalized (multiply, no divide).
    o_ref[0] = acc_ref[:, :out_w] * inv_ref[...]

    # Slide the window: carry the unfinished tail to the origin, zero the rest.
    tail = acc_ref[:, out_w:out_w + k_pad]
    acc_ref[:, 0:k_pad] = tail
    acc_ref[:, k_pad:out_w + k_pad] = jnp.zeros((rows, out_w), jnp.float32)


@functools.partial(
    jax.jit,
    static_argnames=("stride", "k_pad", "tb", "t_pad", "c_pad", "n_bblk",
                     "trim", "l_trim"))
def _istft_forward(x_bct, weight, inv_coff, *, stride, k_pad, tb, t_pad,
                   c_pad, n_bblk, trim, l_trim):
    B, C, T = x_bct.shape
    bp = n_bblk * _SUB
    out_w = tb * stride
    n_tblk = t_pad // tb
    acc_w = out_w + k_pad

    # [B, C, T] -> per batch block, frame-major / batch-minor rows:
    # [n_bblk, t_pad*8, c_pad]; padded frames / batches / channels are zeros.
    x = jnp.transpose(x_bct, (2, 0, 1)).astype(weight.dtype)
    x = jnp.pad(x, ((0, t_pad - T), (0, bp - B), (0, c_pad - C)))
    x = x.reshape(t_pad, n_bblk, _SUB, c_pad).transpose(1, 0, 2, 3)
    x = x.reshape(n_bblk, t_pad * _SUB, c_pad)

    kernel = functools.partial(_istft_stream_kernel, stride=stride,
                               k_pad=k_pad, tb=tb)
    out = pl.pallas_call(
        kernel,
        out_shape=jax.ShapeDtypeStruct((n_bblk, _SUB, t_pad * stride),
                                       jnp.float32),
        grid=(n_bblk, n_tblk),
        in_specs=[
            pl.BlockSpec((1, tb * _SUB, c_pad), lambda b, i: (b, i, 0)),
            # Constant-index operands; (a pl.Buffered(1) pipeline_mode would
            # drop their redundant second VMEM buffer -- left default here).
            pl.BlockSpec((c_pad, k_pad), lambda b, i: (0, 0)),
            pl.BlockSpec((1, out_w), lambda b, i: (0, i)),
        ],
        out_specs=pl.BlockSpec((1, _SUB, out_w), lambda b, i: (b, 0, i)),
        scratch_shapes=[
            pltpu.VMEM((tb * _SUB, k_pad), jnp.float32),   # MXU result staging
            pltpu.VMEM((_SUB, acc_w), jnp.float32),        # sliding OA window
        ],
        compiler_params=pltpu.CompilerParams(
            # Batch blocks are independent (v7x megacore); frame blocks carry
            # the overlap tail -> sequential.
            dimension_semantics=("parallel", "arbitrary"),
            # Footprint is O(tb*(C+K)) so this is generous headroom; 48 MiB is
            # safe on v5e/v6e (128 MiB physical) and v7x (64 MiB physical).
            vmem_limit_bytes=48 * 1024 * 1024,
        ),
    )(x, weight, inv_coff)

    # Trim (win_len - stride) samples from both ends, as in the PyTorch module.
    out = out.reshape(bp, t_pad * stride)[:B, trim:trim + l_trim]
    return out.reshape(B, 1, l_trim)


class ConviSTFT1Pallas:
    def __init__(self, win_len, win_inc, fft_len=None, win_type="hamming",
                 weight_dtype=jnp.float32):
        if fft_len is None:
            fft_len = int(2 ** np.ceil(np.log2(win_len)))
        self.fft_len = fft_len
        self.win_len = win_len
        self.stride = win_inc
        weight, window = init_kernels(win_len, fft_len, win_type)
        self.weight = weight            # [fft_len+2, win_len] (numpy, for ref)
        self.window = window            # [win_len]
        C = fft_len + 2
        self._c_pad = _round_up(C, 128)
        self._k_pad = _round_up(win_len, 128)
        # Zero-padded contraction (C) and tap (K) dims contribute nothing
        # numerically; weight built & uploaded ONCE, reused across calls.
        w_padded = np.zeros((self._c_pad, self._k_pad), np.float32)
        w_padded[:C, :win_len] = weight
        self._w_dev = jnp.asarray(w_padded, dtype=weight_dtype)
        # Frames per grid step: multiple of 128/gcd(stride,128) so each step's
        # output chunk (tb*stride lanes) is 128-aligned; sized so tb*8 rows
        # roughly fill the MXU M dimension (256; two passes on v5e's 128x128).
        t_align = 128 // math.gcd(self.stride, 128)
        self._tb = t_align * max(1, int(round(256 / (t_align * _SUB))))
        self._inv_coff_cache = {}       # keyed by T

    def __call__(self, inputs, phase=None):
        # inputs: [B, fft_len+2, T] (complex spec) or [B, fft_len//2+1, T] mags.
        if phase is not None:
            real = inputs * jnp.cos(phase)
            imag = inputs * jnp.sin(phase)
            inputs = jnp.concatenate([real, imag], axis=1)

        B, C, T = inputs.shape
        assert C == self.fft_len + 2, (C, self.fft_len + 2)
        K, stride = self.win_len, self.stride
        trim = K - stride
        l_trim = (T + 1) * stride - K            # == L - 2*(K - stride)
        assert l_trim > 0, "signal too short for the requested trim"

        tb = self._tb
        t_pad = _round_up(T, tb)                 # padded frames are zeros
        n_bblk = (B + _SUB - 1) // _SUB

        if T not in self._inv_coff_cache:
            self._inv_coff_cache[T] = jnp.asarray(
                _build_inv_coff(self.window, T, stride, t_pad * stride))
        inv_coff = self._inv_coff_cache[T]

        return _istft_forward(
            inputs, self._w_dev, inv_coff,
            stride=stride, k_pad=self._k_pad, tb=tb, t_pad=t_pad,
            c_pad=self._c_pad, n_bblk=n_bblk, trim=trim, l_trim=l_trim)


# ----------------------------------------------------------------------------
# Pure-numpy (float64) reference of the PyTorch forward (correctness check)
# ----------------------------------------------------------------------------
def _numpy_reference(x, weight2d, window, stride, win_len):
    x = np.asarray(x, np.float64)
    w = np.asarray(weight2d, np.float64)
    B, C, T = x.shape
    K = win_len
    L = (T - 1) * stride + K
    out = np.zeros((B, 1, L), np.float64)
    for b in range(B):
        frames = x[b].T @ w                              # [T, K]
        for t in range(T):
            out[b, 0, t * stride:t * stride + K] += frames[t]
    coff = np.zeros((L,), np.float64)
    for t in range(T):
        coff[t * stride:t * stride + K] += np.asarray(window, np.float64) ** 2
    out = out / (coff + 1e-8)
    trim = K - stride
    return out[..., trim:L - trim]


if __name__ == "__main__":
    # Small, self-consistent shapes: win_len=32, hop=8, fft_len=32 -> C=34.
    # T=64 gives two frame blocks (tb=32), exercising the carry across steps.
    B, win_len, win_inc, fft_len, T = 2, 32, 8, 32, 64
    C = fft_len + 2

    key = jax.random.PRNGKey(0)
    k1, k2, k3 = jax.random.split(key, 3)

    model = ConviSTFT1Pallas(win_len, win_inc, fft_len, win_type="hamming")

    # Tolerance covers MXU f32 pass rounding vs the float64 host reference
    # (the f32 path is typically ~1e-6 accurate; margin keeps this portable
    # across TPU generations / matmul pass decompositions).
    ATOL = RTOL = 2e-3

    # --- complex-spectrogram path ---
    x = jax.random.normal(k1, (B, C, T), dtype=jnp.float32)
    y = jax.block_until_ready(model(x))
    ref = _numpy_reference(np.asarray(x), model.weight, model.window,
                           win_inc, win_len)
    assert y.shape == ref.shape, (y.shape, ref.shape)
    assert np.allclose(np.asarray(y), ref, atol=ATOL, rtol=RTOL)

    # --- magnitude + phase path ---
    mags = jnp.abs(jax.random.normal(k2, (B, fft_len // 2 + 1, T),
                                     dtype=jnp.float32))
    phase = jax.random.uniform(k3, (B, fft_len // 2 + 1, T),
                               dtype=jnp.float32, minval=-np.pi, maxval=np.pi)
    y2 = jax.block_until_ready(model(mags, phase))
    x2 = np.concatenate([np.asarray(mags) * np.cos(np.asarray(phase)),
                         np.asarray(mags) * np.sin(np.asarray(phase))],
                        axis=1).astype(np.float32)
    ref2 = _numpy_reference(x2, model.weight, model.window, win_inc, win_len)
    assert y2.shape == ref2.shape, (y2.shape, ref2.shape)
    assert np.allclose(np.asarray(y2), ref2, atol=ATOL, rtol=RTOL)

    print("KERNEL_OK")
</pallas_src>

<mosaic_0001>
module attributes {stable_mosaic.version = 11 : i64} {
  func.func @_istft_stream_kernel(%arg0: i32, %arg1: i32, %arg2: memref<1x256x128xf32, #tpu.memory_space<vmem>>, %arg3: memref<128x128xf32, #tpu.memory_space<vmem>>, %arg4: memref<1x256xf32, #tpu.memory_space<vmem>>, %arg5: memref<1x8x256xf32, #tpu.memory_space<vmem>>, %arg6: memref<256x128xf32, #tpu.memory_space<vmem>>, %arg7: memref<8x384xf32, #tpu.memory_space<vmem>>) attributes {dimension_semantics = [#tpu.dimension_semantics<parallel>, #tpu.dimension_semantics<arbitrary>], iteration_bounds = array<i64: 1, 2>, scalar_prefetch = 0 : i64, scratch_operands = 2 : i64, tpu.core_type = #tpu.core_type<tc>, window_params = [{transform_indices = @transform_0, window_bounds = array<i64: 1, 256, 128>}, {pipeline_mode = #tpu.pipeline_mode<synchronous>, transform_indices = @transform_1, window_bounds = array<i64: 128, 128>}, {transform_indices = @transform_2, window_bounds = array<i64: 1, 256>}, {transform_indices = @transform_3, window_bounds = array<i64: 1, 8, 256>}]} {
    %c0_i32 = arith.constant 0 : i32
    %0 = arith.cmpi eq, %arg1, %c0_i32 : i32
    %1 = arith.extui %0 : i1 to i32
    %c0_i32_0 = arith.constant 0 : i32
    %2 = arith.cmpi ne, %1, %c0_i32_0 : i32
    scf.if %2 {
      %cst_181 = arith.constant 0.000000e+00 : f32
      %147 = vector.broadcast %cst_181 : f32 to vector<8x384xf32>
      %c0_182 = arith.constant 0 : index
      %c0_183 = arith.constant 0 : index
      %148 = vector.load %arg7[%c0_182, %c0_183] : memref<8x384xf32, #tpu.memory_space<vmem>>, vector<8x384xf32>
      tpu.vector_store %arg7[%c0_182, %c0_183], %147 {strides = array<i32>} : memref<8x384xf32, #tpu.memory_space<vmem>>, vector<8x384xf32>,
    } else {
    }
    %c0 = arith.constant 0 : index
    %c0_1 = arith.constant 0 : index
    %c0_2 = arith.constant 0 : index
    %3 = vector.load %arg2[%c0, %c0_1, %c0_2] : memref<1x256x128xf32, #tpu.memory_space<vmem>>, vector<1x256x128xf32>
    %4 = vector.shape_cast %3 : vector<1x256x128xf32> to vector<256x128xf32>
    %c0_3 = arith.constant 0 : index
    %c0_4 = arith.constant 0 : index
    %5 = vector.load %arg3[%c0_3, %c0_4] : memref<128x128xf32, #tpu.memory_space<vmem>>, vector<128x128xf32>
    %cst = arith.constant dense<0.000000e+00> : vector<256x128xf32>
    %6 = tpu.matmul %4, %5, %cst {dimension_numbers = #tpu.dot_dimension_numbers<[1], [0], [0], [1], [0, 0, 1, 1], [], []>} : vector<256x128xf32>, vector<128x128xf32>, vector<256x128xf32> -> vector<256x128xf32>
    %c0_5 = arith.constant 0 : index
    %c0_6 = arith.constant 0 : index
    %7 = vector.load %arg6[%c0_5, %c0_6] : memref<256x128xf32, #tpu.memory_space<vmem>>, vector<256x128xf32>
    tpu.vector_store %arg6[%c0_5, %c0_6], %6 {strides = array<i32>} : memref<256x128xf32, #tpu.memory_space<vmem>>, vector<256x128xf32>,
    %c0_7 = arith.constant 0 : index
    %c0_8 = arith.constant 0 : index
    %8 = vector.load %arg7[%c0_7, %c0_8] : memref<8x384xf32, #tpu.memory_space<vmem>>, vector<8x128xf32>
    %c0_9 = arith.constant 0 : index
    %c0_10 = arith.constant 0 : index
    %9 = vector.load %arg6[%c0_9, %c0_10] : memref<256x128xf32, #tpu.memory_space<vmem>>, vector<8x128xf32>
    %10 = arith.addf %8, %9 : vector<8x128xf32>
    %c0_11 = arith.constant 0 : index
    %c0_12 = arith.constant 0 : index
    %11 = vector.load %arg7[%c0_11, %c0_12] : memref<8x384xf32, #tpu.memory_space<vmem>>, vector<8x128xf32>
    tpu.vector_store %arg7[%c0_11, %c0_12], %10 {strides = array<i32>} : memref<8x384xf32, #tpu.memory_space<vmem>>, vector<8x128xf32>,
    %c0_13 = arith.constant 0 : index
    %c8 = arith.constant 8 : index
    %12 = vector.load %arg7[%c0_13, %c8] : memref<8x384xf32, #tpu.memory_space<vmem>>, vector<8x128xf32>
    %c8_14 = arith.constant 8 : index
    %c0_15 = arith.constant 0 : index
    %13 = vector.load %arg6[%c8_14, %c0_15] : memref<256x128xf32, #tpu.memory_space<vmem>>, vector<8x128xf32>
    %14 = arith.addf %12, %13 : vector<8x128xf32>
    %c0_16 = arith.constant 0 : index
    %c8_17 = arith.constant 8 : index
    %15 = vector.load %arg7[%c0_16, %c8_17] : memref<8x384xf32, #tpu.memory_space<vmem>>, vector<8x128xf32>
    tpu.vector_store %arg7[%c0_16, %c8_17], %14 {strides = array<i32>} : memref<8x384xf32, #tpu.memory_space<vmem>>, vector<8x128xf32>,
    %c0_18 = arith.constant 0 : index
    %c16 = arith.constant 16 : index
    %16 = vector.load %arg7[%c0_18, %c16] : memref<8x384xf32, #tpu.memory_space<vmem>>, vector<8x128xf32>
    %c16_19 = arith.constant 16 : index
    %c0_20 = arith.constant 0 : index
    %17 = vector.load %arg6[%c16_19, %c0_20] : memref<256x128xf32, #tpu.memory_space<vmem>>, vector<8x128xf32>
    %18 = arith.addf %16, %17 : vector<8x128xf32>
    %c0_21 = arith.constant 0 : index
    %c16_22 = arith.constant 16 : index
    %19 = vector.load %arg7[%c0_21, %c16_22] : memref<8x384xf32, #tpu.memory_space<vmem>>, vector<8x128xf32>
    tpu.vector_store %arg7[%c0_21, %c16_22], %18 {strides = array<i32>} : memref<8x384xf32, #tpu.memory_space<vmem>>, vector<8x128xf32>,
    %c0_23 = arith.constant 0 : index
    %c24 = arith.constant 24 : index
    %20 = vector.load %arg7[%c0_23, %c24] : memref<8x384xf32, #tpu.memory_space<vmem>>, vector<8x128xf32>
    %c24_24 = arith.constant 24 : index
    %c0_25 = arith.constant 0 : index
    %21 = vector.load %arg6[%c24_24, %c0_25] : memref<256x128xf32, #tpu.memory_space<vmem>>, vector<8x128xf32>
    %22 = arith.addf %20, %21 : vector<8x128xf32>
    %c0_26 = arith.constant 0 : index
    %c24_27 = arith.constant 24 : index
    %23 = vector.load %arg7[%c0_26, %c24_27] : memref<8x384xf32, #tpu.memory_space<vmem>>, vector<8x128xf32>
    tpu.vector_store %arg7[%c0_26, %c24_27], %22 {strides = array<i32>} : memref<8x384xf32, #tpu.memory_space<vmem>>, vector<8x128xf32>,
    %c0_28 = arith.constant 0 : index
    %c32 = arith.constant 32 : index
    %24 = vector.load %arg7[%c0_28, %c32] : memref<8x384xf32, #tpu.memory_space<vmem>>, vector<8x128xf32>
    %c32_29 = arith.constant 32 : index
    %c0_30 = arith.constant 0 : index
    %25 = vector.load %arg6[%c32_29, %c0_30] : memref<256x128xf32, #tpu.memory_space<vmem>>, vector<8x128xf32>
    %26 = arith.addf %24, %25 : vector<8x128xf32>
    %c0_31 = arith.constant 0 : index
    %c32_32 = arith.constant 32 : index
    %27 = vector.load %arg7[%c0_31, %c32_32] : memref<8x384xf32, #tpu.memory_space<vmem>>, vector<8x128xf32>
    tpu.vector_store %arg7[%c0_31, %c32_32], %26 {strides = array<i32>} : memref<8x384xf32, #tpu.memory_space<vmem>>, vector<8x128xf32>,
    %c0_33 = arith.constant 0 : index
    %c40 = arith.constant 40 : index
    %28 = vector.load %arg7[%c0_33, %c40] : memref<8x384xf32, #tpu.memory_space<vmem>>, vector<8x128xf32>
    %c40_34 = arith.constant 40 : index
    %c0_35 = arith.constant 0 : index
    %29 = vector.load %arg6[%c40_34, %c0_35] : memref<256x128xf32, #tpu.memory_space<vmem>>, vector<8x128xf32>
    %30 = arith.addf %28, %29 : vector<8x128xf32>
    %c0_36 = arith.constant 0 : index
    %c40_37 = arith.constant 40 : index
    %31 = vector.load %arg7[%c0_36, %c40_37] : memref<8x384xf32, #tpu.memory_space<vmem>>, vector<8x128xf32>
    tpu.vector_store %arg7[%c0_36, %c40_37], %30 {strides = array<i32>} : memref<8x384xf32, #tpu.memory_space<vmem>>, vector<8x128xf32>,
    %c0_38 = arith.constant 0 : index
    %c48 = arith.constant 48 : index
    %32 = vector.load %arg7[%c0_38, %c48] : memref<8x384xf32, #tpu.memory_space<vmem>>, vector<8x128xf32>
    %c48_39 = arith.constant 48 : index
    %c0_40 = arith.constant 0 : index
    %33 = vector.load %arg6[%c48_39, %c0_40] : memref<256x128xf32, #tpu.memory_space<vmem>>, vector<8x128xf32>
    %34 = arith.addf %32, %33 : vector<8x128xf32>
    %c0_41 = arith.constant 0 : index
    %c48_42 = arith.constant 48 : index
    %35 = vector.load %arg7[%c0_41, %c48_42] : memref<8x384xf32, #tpu.memory_space<vmem>>, vector<8x128xf32>
    tpu.vector_store %arg7[%c0_41, %c48_42], %34 {strides = array<i32>} : memref<8x384xf32, #tpu.memory_space<vmem>>, vector<8x128xf32>,
    %c0_43 = arith.constant 0 : index
    %c56 = arith.constant 56 : index
    %36 = vector.load %arg7[%c0_43, %c56] : memref<8x384xf32, #tpu.memory_space<vmem>>, vector<8x128xf32>
    %c56_44 = arith.constant 56 : index
    %c0_45 = arith.constant 0 : index
    %37 = vector.load %arg6[%c56_44, %c0_45] : memref<256x128xf32, #tpu.memory_space<vmem>>, vector<8x128xf32>
    %38 = arith.addf %36, %37 : vector<8x128xf32>
    %c0_46 = arith.constant 0 : index
    %c56_47 = arith.constant 56 : index
    %39 = vector.load %arg7[%c0_46, %c56_47] : memref<8x384xf32, #tpu.memory_space<vmem>>, vector<8x128xf32>
    tpu.vector_store %arg7[%c0_46, %c56_47], %38 {strides = array<i32>} : memref<8x384xf32, #tpu.memory_space<vmem>>, vector<8x128xf32>,
    %c0_48 = arith.constant 0 : index
    %c64 = arith.constant 64 : index
    %40 = vector.load %arg7[%c0_48, %c64] : memref<8x384xf32, #tpu.memory_space<vmem>>, vector<8x128xf32>
    %c64_49 = arith.constant 64 : index
    %c0_50 = arith.constant 0 : index
    %41 = vector.load %arg6[%c64_49, %c0_50] : memref<256x128xf32, #tpu.memory_space<vmem>>, vector<8x128xf32>
    %42 = arith.addf %40, %41 : vector<8x128xf32>
    %c0_51 = arith.constant 0 : index
    %c64_52 = arith.constant 64 : index
    %43 = vector.load %arg7[%c0_51, %c64_52] : memref<8x384xf32, #tpu.memory_space<vmem>>, vector<8x128xf32>
    tpu.vector_store %arg7[%c0_51, %c64_52], %42 {strides = array<i32>} : memref<8x384xf32, #tpu.memory_space<vmem>>, vector<8x128xf32>,
    %c0_53 = arith.constant 0 : index
    %c72 = arith.constant 72 : index
    %44 = vector.load %arg7[%c0_53, %c72] : memref<8x384xf32, #tpu.memory_space<vmem>>, vector<8x128xf32>
    %c72_54 = arith.constant 72 : index
    %c0_55 = arith.constant 0 : index
    %45 = vector.load %arg6[%c72_54, %c0_55] : memref<256x128xf32, #tpu.memory_space<vmem>>, vector<8x128xf32>
    %46 = arith.addf %44, %45 : vector<8x128xf32>
    %c0_56 = arith.constant 0 : index
    %c72_57 = arith.constant 72 : index
    %47 = vector.load %arg7[%c0_56, %c72_57] : memref<8x384xf32, #tpu.memory_space<vmem>>, vector<8x128xf32>
    tpu.vector_store %arg7[%c0_56, %c72_57], %46 {strides = array<i32>} : memref<8x384xf32, #tpu.memory_space<vmem>>, vector<8x128xf32>,
    %c0_58 = arith.constant 0 : index
    %c80 = arith.constant 80 : index
    %48 = vector.load %arg7[%c0_58, %c80] : memref<8x384xf32, #tpu.memory_space<vmem>>, vector<8x128xf32>
    %c80_59 = arith.constant 80 : index
    %c0_60 = arith.constant 0 : index
    %49 = vector.load %arg6[%c80_59, %c0_60] : memref<256x128xf32, #tpu.memory_space<vmem>>, vector<8x128xf32>
    %50 = arith.addf %48, %49 : vector<8x128xf32>
    %c0_61 = arith.constant 0 : index
    %c80_62 = arith.constant 80 : index
    %51 = vector.load %arg7[%c0_61, %c80_62] : memref<8x384xf32, #tpu.memory_space<vmem>>, vector<8x128xf32>
    tpu.vector_store %arg7[%c0_61, %c80_62], %50 {strides = array<i32>} : memref<8x384xf32, #tpu.memory_space<vmem>>, vector<8x128xf32>,
    %c0_63 = arith.constant 0 : index
    %c88 = arith.constant 88 : index
    %52 = vector.load %arg7[%c0_63, %c88] : memref<8x384xf32, #tpu.memory_space<vmem>>, vector<8x128xf32>
    %c88_64 = arith.constant 88 : index
    %c0_65 = arith.constant 0 : index
    %53 = vector.load %arg6[%c88_64, %c0_65] : memref<256x128xf32, #tpu.memory_space<vmem>>, vector<8x128xf32>
    %54 = arith.addf %52, %53 : vector<8x128xf32>
    %c0_66 = arith.constant 0 : index
    %c88_67 = arith.constant 88 : index
    %55 = vector.load %arg7[%c0_66, %c88_67] : memref<8x384xf32, #tpu.memory_space<vmem>>, vector<8x128xf32>
    tpu.vector_store %arg7[%c0_66, %c88_67], %54 {strides = array<i32>} : memref<8x384xf32, #tpu.memory_space<vmem>>, vector<8x128xf32>,
    %c0_68 = arith.constant 0 : index
    %c96 = arith.constant 96 : index
    %56 = vector.load %arg7[%c0_68, %c96] : memref<8x384xf32, #tpu.memory_space<vmem>>, vector<8x128xf32>
    %c96_69 = arith.constant 96 : index
    %c0_70 = arith.constant 0 : index
    %57 = vector.load %arg6[%c96_69, %c0_70] : memref<256x128xf32, #tpu.memory_space<vmem>>, vector<8x128xf32>
    %58 = arith.addf %56, %57 : vector<8x128xf32>
    %c0_71 = arith.constant 0 : index
    %c96_72 = arith.constant 96 : index
    %59 = vector.load %arg7[%c0_71, %c96_72] : memref<8x384xf32, #tpu.memory_space<vmem>>, vector<8x128xf32>
    tpu.vector_store %arg7[%c0_71, %c96_72], %58 {strides = array<i32>} : memref<8x384xf32, #tpu.memory_space<vmem>>, vector<8x128xf32>,
    %c0_73 = arith.constant 0 : index
    %c104 = arith.constant 104 : index
    %60 = vector.load %arg7[%c0_73, %c104] : memref<8x384xf32, #tpu.memory_space<vmem>>, vector<8x128xf32>
    %c104_74 = arith.constant 104 : index
    %c0_75 = arith.constant 0 : index
    %61 = vector.load %arg6[%c104_74, %c0_75] : memref<256x128xf32, #tpu.memory_space<vmem>>, vector<8x128xf32>
    %62 = arith.addf %60, %61 : vector<8x128xf32>
    %c0_76 = arith.constant 0 : index
    %c104_77 = arith.constant 104 : index
    %63 = vector.load %arg7[%c0_76, %c104_77] : memref<8x384xf32, #tpu.memory_space<vmem>>, vector<8x128xf32>
    tpu.vector_store %arg7[%c0_76, %c104_77], %62 {strides = array<i32>} : memref<8x384xf32, #tpu.memory_space<vmem>>, vector<8x128xf32>,
    %c0_78 = arith.constant 0 : index
    %c112 = arith.constant 112 : index
    %64 = vector.load %arg7[%c0_78, %c112] : memref<8x384xf32, #tpu.memory_space<vmem>>, vector<8x128xf32>
    %c112_79 = arith.constant 112 : index
    %c0_80 = arith.constant 0 : index
    %65 = vector.load %arg6[%c112_79, %c0_80] : memref<256x128xf32, #tpu.memory_space<vmem>>, vector<8x128xf32>
    %66 = arith.addf %64, %65 : vector<8x128xf32>
    %c0_81 = arith.constant 0 : index
    %c112_82 = arith.constant 112 : index
    %67 = vector.load %arg7[%c0_81, %c112_82] : memref<8x384xf32, #tpu.memory_space<vmem>>, vector<8x128xf32>
    tpu.vector_store %arg7[%c0_81, %c112_82], %66 {strides = array<i32>} : memref<8x384xf32, #tpu.memory_space<vmem>>, vector<8x128xf32>,
    %c0_83 = arith.constant 0 : index
    %c120 = arith.constant 120 : index
    %68 = vector.load %arg7[%c0_83, %c120] : memref<8x384xf32, #tpu.memory_space<vmem>>, vector<8x128xf32>
    %c120_84 = arith.constant 120 : index
    %c0_85 = arith.constant 0 : index
    %69 = vector.load %arg6[%c120_84, %c0_85] : memref<256x128xf32, #tpu.memory_space<vmem>>, vector<8x128xf32>
    %70 = arith.addf %68, %69 : vector<8x128xf32>
    %c0_86 = arith.constant 0 : index
    %c120_87 = arith.constant 120 : index
    %71 = vector.load %arg7[%c0_86, %c120_87] : memref<8x384xf32, #tpu.memory_space<vmem>>, vector<8x128xf32>
    tpu.vector_store %arg7[%c0_86, %c120_87], %70 {strides = array<i32>} : memref<8x384xf32, #tpu.memory_space<vmem>>, vector<8x128xf32>,
    %c0_88 = arith.constant 0 : index
    %c128 = arith.constant 128 : index
    %72 = vector.load %arg7[%c0_88, %c128] : memref<8x384xf32, #tpu.memory_space<vmem>>, vector<8x128xf32>
    %c128_89 = arith.constant 128 : index
    %c0_90 = arith.constant 0 : index
    %73 = vector.load %arg6[%c128_89, %c0_90] : memref<256x128xf32, #tpu.memory_space<vmem>>, vector<8x128xf32>
    %74 = arith.addf %72, %73 : vector<8x128xf32>
    %c0_91 = arith.constant 0 : index
    %c128_92 = arith.constant 128 : index
    %75 = vector.load %arg7[%c0_91, %c128_92] : memref<8x384xf32, #tpu.memory_space<vmem>>, vector<8x128xf32>
    tpu.vector_store %arg7[%c0_91, %c128_92], %74 {strides = array<i32>} : memref<8x384xf32, #tpu.memory_space<vmem>>, vector<8x128xf32>,
    %c0_93 = arith.constant 0 : index
    %c136 = arith.constant 136 : index
    %76 = vector.load %arg7[%c0_93, %c136] : memref<8x384xf32, #tpu.memory_space<vmem>>, vector<8x128xf32>
    %c136_94 = arith.constant 136 : index
    %c0_95 = arith.constant 0 : index
    %77 = vector.load %arg6[%c136_94, %c0_95] : memref<256x128xf32, #tpu.memory_space<vmem>>, vector<8x128xf32>
    %78 = arith.addf %76, %77 : vector<8x128xf32>
    %c0_96 = arith.constant 0 : index
    %c136_97 = arith.constant 136 : index
    %79 = vector.load %arg7[%c0_96, %c136_97] : memref<8x384xf32, #tpu.memory_space<vmem>>, vector<8x128xf32>
    tpu.vector_store %arg7[%c0_96, %c136_97], %78 {strides = array<i32>} : memref<8x384xf32, #tpu.memory_space<vmem>>, vector<8x128xf32>,
    %c0_98 = arith.constant 0 : index
    %c144 = arith.constant 144 : index
    %80 = vector.load %arg7[%c0_98, %c144] : memref<8x384xf32, #tpu.memory_space<vmem>>, vector<8x128xf32>
    %c144_99 = arith.constant 144 : index
    %c0_100 = arith.constant 0 : index
    %81 = vector.load %arg6[%c144_99, %c0_100] : memref<256x128xf32, #tpu.memory_space<vmem>>, vector<8x128xf32>
    %82 = arith.addf %80, %81 : vector<8x128xf32>
    %c0_101 = arith.constant 0 : index
    %c144_102 = arith.constant 144 : index
    %83 = vector.load %arg7[%c0_101, %c144_102] : memref<8x384xf32, #tpu.memory_space<vmem>>, vector<8x128xf32>
    tpu.vector_store %arg7[%c0_101, %c144_102], %82 {strides = array<i32>} : memref<8x384xf32, #tpu.memory_space<vmem>>, vector<8x128xf32>,
    %c0_103 = arith.constant 0 : index
    %c152 = arith.constant 152 : index
    %84 = vector.load %arg7[%c0_103, %c152] : memref<8x384xf32, #tpu.memory_space<vmem>>, vector<8x128xf32>
    %c152_104 = arith.constant 152 : index
    %c0_105 = arith.constant 0 : index
    %85 = vector.load %arg6[%c152_104, %c0_105] : memref<256x128xf32, #tpu.memory_space<vmem>>, vector<8x128xf32>
    %86 = arith.addf %84, %85 : vector<8x128xf32>
    %c0_106 = arith.constant 0 : index
    %c152_107 = arith.constant 152 : index
    %87 = vector.load %arg7[%c0_106, %c152_107] : memref<8x384xf32, #tpu.memory_space<vmem>>, vector<8x128xf32>
    tpu.vector_store %arg7[%c0_106, %c152_107], %86 {strides = array<i32>} : memref<8x384xf32, #tpu.memory_space<vmem>>, vector<8x128xf32>,
    %c0_108 = arith.constant 0 : index
    %c160 = arith.constant 160 : index
    %88 = vector.load %arg7[%c0_108, %c160] : memref<8x384xf32, #tpu.memory_space<vmem>>, vector<8x128xf32>
    %c160_109 = arith.constant 160 : index
    %c0_110 = arith.constant 0 : index
    %89 = vector.load %arg6[%c160_109, %c0_110] : memref<256x128xf32, #tpu.memory_space<vmem>>, vector<8x128xf32>
    %90 = arith.addf %88, %89 : vector<8x128xf32>
    %c0_111 = arith.constant 0 : index
    %c160_112 = arith.constant 160 : index
    %91 = vector.load %arg7[%c0_111, %c160_112] : memref<8x384xf32, #tpu.memory_space<vmem>>, vector<8x128xf32>
    tpu.vector_store %arg7[%c0_111, %c160_112], %90 {strides = array<i32>} : memref<8x384xf32, #tpu.memory_space<vmem>>, vector<8x128xf32>,
    %c0_113 = arith.constant 0 : index
    %c168 = arith.constant 168 : index
    %92 = vector.load %arg7[%c0_113, %c168] : memref<8x384xf32, #tpu.memory_space<vmem>>, vector<8x128xf32>
    %c168_114 = arith.constant 168 : index
    %c0_115 = arith.constant 0 : index
    %93 = vector.load %arg6[%c168_114, %c0_115] : memref<256x128xf32, #tpu.memory_space<vmem>>, vector<8x128xf32>
    %94 = arith.addf %92, %93 : vector<8x128xf32>
    %c0_116 = arith.constant 0 : index
    %c168_117 = arith.constant 168 : index
    %95 = vector.load %arg7[%c0_116, %c168_117] : memref<8x384xf32, #tpu.memory_space<vmem>>, vector<8x128xf32>
    tpu.vector_store %arg7[%c0_116, %c168_117], %94 {strides = array<i32>} : memref<8x384xf32, #tpu.memory_space<vmem>>, vector<8x128xf32>,
    %c0_118 = arith.constant 0 : index
    %c176 = arith.constant 176 : index
    %96 = vector.load %arg7[%c0_118, %c176] : memref<8x384xf32, #tpu.memory_space<vmem>>, vector<8x128xf32>
    %c176_119 = arith.constant 176 : index
    %c0_120 = arith.constant 0 : index
    %97 = vector.load %arg6[%c176_119, %c0_120] : memref<256x128xf32, #tpu.memory_space<vmem>>, vector<8x128xf32>
    %98 = arith.addf %96, %97 : vector<8x128xf32>
    %c0_121 = arith.constant 0 : index
    %c176_122 = arith.constant 176 : index
    %99 = vector.load %arg7[%c0_121, %c176_122] : memref<8x384xf32, #tpu.memory_space<vmem>>, vector<8x128xf32>
    tpu.vector_store %arg7[%c0_121, %c176_122], %98 {strides = array<i32>} : memref<8x384xf32, #tpu.memory_space<vmem>>, vector<8x128xf32>,
    %c0_123 = arith.constant 0 : index
    %c184 = arith.constant 184 : index
    %100 = vector.load %arg7[%c0_123, %c184] : memref<8x384xf32, #tpu.memory_space<vmem>>, vector<8x128xf32>
    %c184_124 = arith.constant 184 : index
    %c0_125 = arith.constant 0 : index
    %101 = vector.load %arg6[%c184_124, %c0_125] : memref<256x128xf32, #tpu.memory_space<vmem>>, vector<8x128xf32>
    %102 = arith.addf %100, %101 : vector<8x128xf32>
    %c0_126 = arith.constant 0 : index
    %c184_127 = arith.constant 184 : index
    %103 = vector.load %arg7[%c0_126, %c184_127] : memref<8x384xf32, #tpu.memory_space<vmem>>, vector<8x128xf32>
    tpu.vector_store %arg7[%c0_126, %c184_127], %102 {strides = array<i32>} : memref<8x384xf32, #tpu.memory_space<vmem>>, vector<8x128xf32>,
    %c0_128 = arith.constant 0 : index
    %c192 = arith.constant 192 : index
    %104 = vector.load %arg7[%c0_128, %c192] : memref<8x384xf32, #tpu.memory_space<vmem>>, vector<8x128xf32>
    %c192_129 = arith.constant 192 : index
    %c0_130 = arith.constant 0 : index
    %105 = vector.load %arg6[%c192_129, %c0_130] : memref<256x128xf32, #tpu.memory_space<vmem>>, vector<8x128xf32>
    %106 = arith.addf %104, %105 : vector<8x128xf32>
    %c0_131 = arith.constant 0 : index
    %c192_132 = arith.constant 192 : index
    %107 = vector.load %arg7[%c0_131, %c192_132] : memref<8x384xf32, #tpu.memory_space<vmem>>, vector<8x128xf32>
    tpu.vector_store %arg7[%c0_131, %c192_132], %106 {strides = array<i32>} : memref<8x384xf32, #tpu.memory_space<vmem>>, vector<8x128xf32>,
    %c0_133 = arith.constant 0 : index
    %c200 = arith.constant 200 : index
    %108 = vector.load %arg7[%c0_133, %c200] : memref<8x384xf32, #tpu.memory_space<vmem>>, vector<8x128xf32>
    %c200_134 = arith.constant 200 : index
    %c0_135 = arith.constant 0 : index
    %109 = vector.load %arg6[%c200_134, %c0_135] : memref<256x128xf32, #tpu.memory_space<vmem>>, vector<8x128xf32>
    %110 = arith.addf %108, %109 : vector<8x128xf32>
    %c0_136 = arith.constant 0 : index
    %c200_137 = arith.constant 200 : index
    %111 = vector.load %arg7[%c0_136, %c200_137] : memref<8x384xf32, #tpu.memory_space<vmem>>, vector<8x128xf32>
    tpu.vector_store %arg7[%c0_136, %c200_137], %110 {strides = array<i32>} : memref<8x384xf32, #tpu.memory_space<vmem>>, vector<8x128xf32>,
    %c0_138 = arith.constant 0 : index
    %c208 = arith.constant 208 : index
    %112 = vector.load %arg7[%c0_138, %c208] : memref<8x384xf32, #tpu.memory_space<vmem>>, vector<8x128xf32>
    %c208_139 = arith.constant 208 : index
    %c0_140 = arith.constant 0 : index
    %113 = vector.load %arg6[%c208_139, %c0_140] : memref<256x128xf32, #tpu.memory_space<vmem>>, vector<8x128xf32>
    %114 = arith.addf %112, %113 : vector<8x128xf32>
    %c0_141 = arith.constant 0 : index
    %c208_142 = arith.constant 208 : index
    %115 = vector.load %arg7[%c0_141, %c208_142] : memref<8x384xf32, #tpu.memory_space<vmem>>, vector<8x128xf32>
    tpu.vector_store %arg7[%c0_141, %c208_142], %114 {strides = array<i32>} : memref<8x384xf32, #tpu.memory_space<vmem>>, vector<8x128xf32>,
    %c0_143 = arith.constant 0 : index
    %c216 = arith.constant 216 : index
    %116 = vector.load %arg7[%c0_143, %c216] : memref<8x384xf32, #tpu.memory_space<vmem>>, vector<8x128xf32>
    %c216_144 = arith.constant 216 : index
    %c0_145 = arith.constant 0 : index
    %117 = vector.load %arg6[%c216_144, %c0_145] : memref<256x128xf32, #tpu.memory_space<vmem>>, vector<8x128xf32>
    %118 = arith.addf %116, %117 : vector<8x128xf32>
    %c0_146 = arith.constant 0 : index
    %c216_147 = arith.constant 216 : index
    %119 = vector.load %arg7[%c0_146, %c216_147] : memref<8x384xf32, #tpu.memory_space<vmem>>, vector<8x128xf32>
    tpu.vector_store %arg7[%c0_146, %c216_147], %118 {strides = array<i32>} : memref<8x384xf32, #tpu.memory_space<vmem>>, vector<8x128xf32>,
    %c0_148 = arith.constant 0 : index
    %c224 = arith.constant 224 : index
    %120 = vector.load %arg7[%c0_148, %c224] : memref<8x384xf32, #tpu.memory_space<vmem>>, vector<8x128xf32>
    %c224_149 = arith.constant 224 : index
    %c0_150 = arith.constant 0 : index
    %121 = vector.load %arg6[%c224_149, %c0_150] : memref<256x128xf32, #tpu.memory_space<vmem>>, vector<8x128xf32>
    %122 = arith.addf %120, %121 : vector<8x128xf32>
    %c0_151 = arith.constant 0 : index
    %c224_152 = arith.constant 224 : index
    %123 = vector.load %arg7[%c0_151, %c224_152] : memref<8x384xf32, #tpu.memory_space<vmem>>, vector<8x128xf32>
    tpu.vector_store %arg7[%c0_151, %c224_152], %122 {strides = array<i32>} : memref<8x384xf32, #tpu.memory_space<vmem>>, vector<8x128xf32>,
    %c0_153 = arith.constant 0 : index
    %c232 = arith.constant 232 : index
    %124 = vector.load %arg7[%c0_153, %c232] : memref<8x384xf32, #tpu.memory_space<vmem>>, vector<8x128xf32>
    %c232_154 = arith.constant 232 : index
    %c0_155 = arith.constant 0 : index
    %125 = vector.load %arg6[%c232_154, %c0_155] : memref<256x128xf32, #tpu.memory_space<vmem>>, vector<8x128xf32>
    %126 = arith.addf %124, %125 : vector<8x128xf32>
    %c0_156 = arith.constant 0 : index
    %c232_157 = arith.constant 232 : index
    %127 = vector.load %arg7[%c0_156, %c232_157] : memref<8x384xf32, #tpu.memory_space<vmem>>, vector<8x128xf32>
    tpu.vector_store %arg7[%c0_156, %c232_157], %126 {strides = array<i32>} : memref<8x384xf32, #tpu.memory_space<vmem>>, vector<8x128xf32>,
    %c0_158 = arith.constant 0 : index
    %c240 = arith.constant 240 : index
    %128 = vector.load %arg7[%c0_158, %c240] : memref<8x384xf32, #tpu.memory_space<vmem>>, vector<8x128xf32>
    %c240_159 = arith.constant 240 : index
    %c0_160 = arith.constant 0 : index
    %129 = vector.load %arg6[%c240_159, %c0_160] : memref<256x128xf32, #tpu.memory_space<vmem>>, vector<8x128xf32>
    %130 = arith.addf %128, %129 : vector<8x128xf32>
    %c0_161 = arith.constant 0 : index
    %c240_162 = arith.constant 240 : index
    %131 = vector.load %arg7[%c0_161, %c240_162] : memref<8x384xf32, #tpu.memory_space<vmem>>, vector<8x128xf32>
    tpu.vector_store %arg7[%c0_161, %c240_162], %130 {strides = array<i32>} : memref<8x384xf32, #tpu.memory_space<vmem>>, vector<8x128xf32>,
    %c0_163 = arith.constant 0 : index
    %c248 = arith.constant 248 : index
    %132 = vector.load %arg7[%c0_163, %c248] : memref<8x384xf32, #tpu.memory_space<vmem>>, vector<8x128xf32>
    %c248_164 = arith.constant 248 : index
    %c0_165 = arith.constant 0 : index
    %133 = vector.load %arg6[%c248_164, %c0_165] : memref<256x128xf32, #tpu.memory_space<vmem>>, vector<8x128xf32>
    %134 = arith.addf %132, %133 : vector<8x128xf32>
    %c0_166 = arith.constant 0 : index
    %c248_167 = arith.constant 248 : index
    %135 = vector.load %arg7[%c0_166, %c248_167] : memref<8x384xf32, #tpu.memory_space<vmem>>, vector<8x128xf32>
    tpu.vector_store %arg7[%c0_166, %c248_167], %134 {strides = array<i32>} : memref<8x384xf32, #tpu.memory_space<vmem>>, vector<8x128xf32>,
    %c0_168 = arith.constant 0 : index
    %c0_169 = arith.constant 0 : index
    %136 = vector.load %arg7[%c0_168, %c0_169] : memref<8x384xf32, #tpu.memory_space<vmem>>, vector<8x256xf32>
    %c0_170 = arith.constant 0 : index
    %c0_171 = arith.constant 0 : index
    %137 = vector.load %arg4[%c0_170, %c0_171] : memref<1x256xf32, #tpu.memory_space<vmem>>, vector<1x256xf32>
    %138 = vector.broadcast %137 : vector<1x256xf32> to vector<8x256xf32>
    %139 = arith.mulf %136, %138 : vector<8x256xf32>
    %c0_172 = arith.constant 0 : index
    %c0_173 = arith.constant 0 : index
    %c0_174 = arith.constant 0 : index
    %140 = vector.load %arg5[%c0_172, %c0_173, %c0_174] : memref<1x8x256xf32, #tpu.memory_space<vmem>>, vector<1x8x256xf32>
    %141 = vector.shape_cast %140 : vector<1x8x256xf32> to vector<8x256xf32>
    %142 = vector.shape_cast %139 : vector<8x256xf32> to vector<1x8x256xf32>
    tpu.vector_store %arg5[%c0_172, %c0_173, %c0_174], %142 {strides = array<i32>} : memref<1x8x256xf32, #tpu.memory_space<vmem>>, vector<1x8x256xf32>,
    %c0_175 = arith.constant 0 : index
    %c256 = arith.constant 256 : index
    %143 = vector.load %arg7[%c0_175, %c256] : memref<8x384xf32, #tpu.memory_space<vmem>>, vector<8x128xf32>
    %c0_176 = arith.constant 0 : index
    %c0_177 = arith.constant 0 : index
    %144 = vector.load %arg7[%c0_176, %c0_177] : memref<8x384xf32, #tpu.memory_space<vmem>>, vector<8x128xf32>
    tpu.vector_store %arg7[%c0_176, %c0_177], %143 {strides = array<i32>} : memref<8x384xf32, #tpu.memory_space<vmem>>, vector<8x128xf32>,
    %cst_178 = arith.constant 0.000000e+00 : f32
    %145 = vector.broadcast %cst_178 : f32 to vector<8x256xf32>
    %c0_179 = arith.constant 0 : index
    %c128_180 = arith.constant 128 : index
    %146 = vector.load %arg7[%c0_179, %c128_180] : memref<8x384xf32, #tpu.memory_space<vmem>>, vector<8x256xf32>
    tpu.vector_store %arg7[%c0_179, %c128_180], %145 {strides = array<i32>} : memref<8x384xf32, #tpu.memory_space<vmem>>, vector<8x256xf32>,
    return
  }
  func.func @transform_0(%arg0: i32, %arg1: i32) -> (i32, i32, i32) {
    %c0_i32 = arith.constant 0 : i32
    %c0_i32_0 = arith.constant 0 : i32
    return %arg0, %arg1, %c0_i32 : i32, i32, i32
  }
  func.func @transform_1(%arg0: i32, %arg1: i32) -> (i32, i32) {
    %c0_i32 = arith.constant 0 : i32
    %c0_i32_0 = arith.constant 0 : i32
    %c0_i32_1 = arith.constant 0 : i32
    return %c0_i32, %c0_i32_0 : i32, i32
  }
  func.func @transform_2(%arg0: i32, %arg1: i32) -> (i32, i32) {
    %c0_i32 = arith.constant 0 : i32
    %c0_i32_0 = arith.constant 0 : i32
    return %c0_i32, %arg1 : i32, i32
  }
  func.func @transform_3(%arg0: i32, %arg1: i32) -> (i32, i32, i32) {
    %c0_i32 = arith.constant 0 : i32
    %c0_i32_0 = arith.constant 0 : i32
    return %arg0, %c0_i32, %arg1 : i32, i32, i32
  }
}

</mosaic_0001>

<llo_original>
// kernel: _istft_forward.1
$region0: #{_istft_forward.1}
  #allocation0 [shape = 'u32[]', space=smem, size = 0x4, offset = 0x4, fixed_abs, tag = 'smem constant byte address 0x4 - core index']
  #allocation1 [shape = 'u32[144,128]{1,0:T(1,128)}', space=vmem, size = 0x12000, scoped, tag = 'internal scratch']
  #allocation2 [shape = 'f32[256,128]{1,0:T(8,128)}', space=vmem, size = 0x20000, scoped, tag = 'scratch operand']
  #allocation3 [shape = 'f32[8,384]{1,0:T(8,128)}', space=vmem, size = 0x3000, scoped, tag = 'scratch operand']
  %s0 = inlined_call_operand.vmem [shape: f32[1,512,128], index: 0, kind: input, shape index: {}]
  %s1 = inlined_call_operand.vmem [shape: f32[128,128], index: 1, kind: input, shape index: {}]
  %s2 = inlined_call_operand.vmem [shape: f32[1,512], index: 2, kind: input, shape index: {}]
  %s3 = inlined_call_operand.vmem [shape: f32[1,8,512], index: 3, kind: output, shape index: {}]
  %s4 = sld [smem:[#allocation0]]
  $region49: #{_istft_forward.1} parent=0
    _
  %s6 = ssub.s32 1, %s4
  %s7 = scalar_select 0, %s6, %s4
  loop: start=0, step=1, limit=4
  $region2: #{_istft_forward.1} parent=0 // loop_pre_header
    _
  $region3: #{_istft_forward.1} parent=0 // loop_header
    %s9 = sphi 0, %s13
    %p10 = scmp.ge.s32.totalorder %s9, 4
    %s16 = sphi 0, %s28
    %s17 = sphi 0, %s24
    %s18 = sphi 0, %s16
    %s19 = sphi 0, %s17
    %s20 = sphi 0, %s18
    %s21 = sphi 0, %s19
    %s33 = sphi 0, %s35
    %s36 = sphi 0, %s33
    %s37 = sphi 0, %s36
    %s53 = sphi 0, %s37
    %s57 = sphi 0, %s57
    %s59 = sphi 0, %s57
    %s60 = sphi 0, %s59
    %s74 = sphi 0, %s60
    %s80 = sphi 0, %s82
    %s83 = sphi 0, %s80
    %s84 = sphi 0, %s83
    %s100 = sphi 0, %s84
    %s108 = sphi 0, %s110
    %s111 = sphi 0, %s108
    %s112 = sphi 0, %s111
    %s128 = sphi 0, %s112
  $region4: #{_istft_forward.1} parent=0 // loop_header_branch
    %12 = sbr.rel (%p10) target = $region8
  $region5: #{_istft_forward.1} parent=0 // loop_body
    %s14 = ssub.s32 %s9, 1
    %s15 = ssub.s32 %s9, 2
    %s22 = sadd.s32 1, %s17
    %p23 = scmp.ge.s32.totalorder %s22, 2
    %s24 = scalar_select %p23, 0, %s22
    %s25 = sadd.s32 1, %s16
    %s26 = scalar_select %p23, %s25, %s16
    %p27 = scmp.ge.s32.totalorder %s26, 1
    %s28 = scalar_select %p27, 0, %s26
    %s29 = ssub.s32 %s16, %s28
    %s30 = ssub.s32 %s17, %s24
    %s31 = sor.u32 %s29, %s30
    %p32 = scmp.eq.s32.totalorder %s31, 0
    %s34 = sadd.s32 %s33, 1
    %s35 = scalar_select %p32, %s33, %s34
    %p38 = pneg %p32
    %p39 = scmp.eq.s32.totalorder %s9, 1
    %p40 = por %p38, %p39
    %p41 = scmp.ne.s32.totalorder %s33, %s36
    %p42 = scmp.eq.s32.totalorder %s9, 0
    %p43 = por %p41, %p42
    %p44 = scmp.ne.s32.totalorder %s33, %s36
    %p45 = scmp.eq.s32.totalorder %s14, 1
    %p46 = por %p44, %p45
    %p47 = scmp.ne.s32.totalorder %s36, %s37
    %p48 = scmp.eq.s32.totalorder %s14, 0
    %p49 = por %p47, %p48
    %p50 = scmp.ne.s32.totalorder %s36, %s37
    %p51 = scmp.eq.s32.totalorder %s15, 1
    %p52 = por %p50, %p51
    %p54 = scmp.ne.s32.totalorder %s37, %s53
    %p55 = scmp.eq.s32.totalorder %s15, 0
    %p56 = por %p54, %p55
    %s58 = sadd.s32 %s57, 1
    %p61 = scmp.eq.s32.totalorder %s9, 1
    %p62 = scmp.ne.s32.totalorder %s57, %s59
    %p63 = scmp.eq.s32.totalorder %s9, 0
    %p64 = por %p62, %p63
    %p65 = scmp.ne.s32.totalorder %s57, %s59
    %p66 = scmp.eq.s32.totalorder %s14, 1
    %p67 = por %p65, %p66
    %p68 = scmp.ne.s32.totalorder %s59, %s60
    %p69 = scmp.eq.s32.totalorder %s14, 0
    %p70 = por %p68, %p69
    %p71 = scmp.ne.s32.totalorder %s59, %s60
    %p72 = scmp.eq.s32.totalorder %s15, 1
    %p73 = por %p71, %p72
    %p75 = scmp.ne.s32.totalorder %s60, %s74
    %p76 = scmp.eq.s32.totalorder %s15, 0
    %p77 = por %p75, %p76
    %s78 = ssub.s32 %s17, %s24
    %p79 = scmp.eq.s32.totalorder %s78, 0
    %s81 = sadd.s32 %s80, 1
    %s82 = scalar_select %p79, %s80, %s81
    %p85 = pneg %p79
    %p86 = scmp.eq.s32.totalorder %s9, 1
    %p87 = por %p85, %p86
    %p88 = scmp.ne.s32.totalorder %s80, %s83
    %p89 = scmp.eq.s32.totalorder %s9, 0
    %p90 = por %p88, %p89
    %p91 = scmp.ne.s32.totalorder %s80, %s83
    %p92 = scmp.eq.s32.totalorder %s14, 1
    %p93 = por %p91, %p92
    %p94 = scmp.ne.s32.totalorder %s83, %s84
    %p95 = scmp.eq.s32.totalorder %s14, 0
    %p96 = por %p94, %p95
    %p97 = scmp.ne.s32.totalorder %s83, %s84
    %p98 = scmp.eq.s32.totalorder %s15, 1
    %p99 = por %p97, %p98
    %p101 = scmp.ne.s32.totalorder %s84, %s100
    %p102 = scmp.eq.s32.totalorder %s15, 0
    %p103 = por %p101, %p102
    %s104 = ssub.s32 %s16, %s28
    %s105 = ssub.s32 %s17, %s24
    %s106 = sor.u32 %s104, %s105
    %p107 = scmp.eq.s32.totalorder %s106, 0
    %s109 = sadd.s32 %s108, 1
    %s110 = scalar_select %p107, %s108, %s109
    %p113 = pneg %p107
    %p114 = scmp.eq.s32.totalorder %s9, 1
    %p115 = por %p113, %p114
    %p116 = scmp.ne.s32.totalorder %s108, %s111
    %p117 = scmp.eq.s32.totalorder %s9, 0
    %p118 = por %p116, %p117
    %p119 = scmp.ne.s32.totalorder %s108, %s111
    %p120 = scmp.eq.s32.totalorder %s14, 1
    %p121 = por %p119, %p120
    %p122 = scmp.ne.s32.totalorder %s111, %s112
    %p123 = scmp.eq.s32.totalorder %s14, 0
    %p124 = por %p122, %p123
    %p125 = scmp.ne.s32.totalorder %s111, %s112
    %p126 = scmp.eq.s32.totalorder %s15, 1
    %p127 = por %p125, %p126
    %p129 = scmp.ne.s32.totalorder %s112, %s128
    %p130 = scmp.eq.s32.totalorder %s15, 0
    %p131 = por %p129, %p130
    %p132 = scmp.le.s32.totalorder 1, %s9
    %p133 = scmp.lt.s32.totalorder %s9, 3
    %p134 = pnand %p132, %p133
    %p135 = pneg %p134
    // Predicated region
    $region9: #{_istft_forward.1} parent=5 // pred_check
      _
    $region10: #{_istft_forward.1} parent=5 // pred_check_branch
      %137 = sbr.rel (%p134) target = $region12
    $region11: #{_istft_forward.1} parent=5 // pred_region
      %s138 = ssub.s32 %s9, 1
      // Predicated region
      $region13: #{_istft_forward.1} parent=11 // pred_check
        %p139 = pneg %p70
      $region14: #{_istft_forward.1} parent=11 // pred_check_branch
        %141 = sbr.rel (%p139) target = $region16
      $region15: #{_istft_forward.1} parent=11 // pred_region
        _
      $region16: #{_istft_forward.1} parent=11 // pred_fallthru
        _
    $region12: #{_istft_forward.1} parent=5 // pred_fallthru
      _
    %p142 = scmp.lt.s32.totalorder %s9, 2
    // Predicated region
    $region17: #{_istft_forward.1} parent=5 // pred_check
      %p143 = pneg %p142
    $region18: #{_istft_forward.1} parent=5 // pred_check_branch
      %145 = sbr.rel (%p143) target = $region20
    $region19: #{_istft_forward.1} parent=5 // pred_region
      // Predicated region
      $region21: #{_istft_forward.1} parent=19 // pred_check
        %p146 = pneg %p43
      $region22: #{_istft_forward.1} parent=19 // pred_check_branch
        %148 = sbr.rel (%p146) target = $region24
      $region23: #{_istft_forward.1} parent=19 // pred_region
        %s149 = smul.u32 32, %s17
        %p150 = scmp.lt.s32.totalorder %s16, 0
        %s151 = scalar_select %p150, %s16, 0
        %p152 = scmp.lt.s32.totalorder %s149, 63
        %s153 = scalar_select %p152, %s149, 63
        %s154 = smul.addr %s151, 64
        %s155 = sadd.s32 %s153, %s154
        %s156 = smul.addr %s155, 8
        %s157 = scalar_lea.vmem %s0, %s156
        %s158 = smul.u32 32, %s17
      $region24: #{_istft_forward.1} parent=19 // pred_fallthru
        _
      // Predicated region
      $region25: #{_istft_forward.1} parent=19 // pred_check
        %p159 = pneg %p90
      $region26: #{_istft_forward.1} parent=19 // pred_check_branch
        %161 = sbr.rel (%p159) target = $region28
      $region27: #{_istft_forward.1} parent=19 // pred_region
        %s162 = smul.u32 2, %s17
        %p163 = scmp.lt.s32.totalorder %s162, 3
        %s164 = scalar_select %p163, %s162, 3
        %s165 = scalar_lea.vmem %s2, %s164
        %s166 = smul.u32 2, %s17
      $region28: #{_istft_forward.1} parent=19 // pred_fallthru
        _
    $region20: #{_istft_forward.1} parent=5 // pred_fallthru
      _
    %p167 = scmp.le.s32.totalorder 1, %s9
    %p168 = scmp.lt.s32.totalorder %s9, 3
    %p169 = pnand %p167, %p168
    %p170 = pneg %p169
    // Predicated region
    $region29: #{_istft_forward.1} parent=5 // pred_check
      _
    $region30: #{_istft_forward.1} parent=5 // pred_check_branch
      %172 = sbr.rel (%p169) target = $region32
    $region31: #{_istft_forward.1} parent=5 // pred_region
      %s173 = ssub.s32 %s9, 1
      %s174 = smul.u32 32, %s19
      %p175 = scmp.lt.s32.totalorder %s18, 0
      %s176 = scalar_select %p175, %s18, 0
      %p177 = scmp.lt.s32.totalorder %s174, 63
      %s178 = scalar_select %p177, %s174, 63
      %s179 = smul.addr %s176, 64
      %s180 = sadd.s32 %s178, %s179
      %s181 = smul.addr %s180, 8
      %s182 = scalar_lea.vmem %s0, %s181
      %p183 = pneg %p49
      %p184 = pneg %p46
      %p185 = pneg %p70
      %p186 = pneg %p67
      %s187 = smul.u32 2, %s19
      %p188 = scmp.lt.s32.totalorder %s187, 3
      %s189 = scalar_select %p188, %s187, 3
      %s190 = scalar_lea.vmem %s2, %s189
      %p191 = pneg %p96
      %p192 = pneg %p93
      %p193 = pneg %p124
      %p194 = pneg %p121
      %s195 = smul.u32 2, %s19
      %p196 = scmp.lt.s32.totalorder %s18, 0
      %s197 = scalar_select %p196, %s18, 0
      %p198 = scmp.lt.s32.totalorder %s195, 3
      %s199 = scalar_select %p198, %s195, 3
      %s200 = smul.addr %s197, 4
      %s201 = sadd.s32 %s199, %s200
      %s202 = smul.addr %s201, 8
      %s203 = scalar_lea.vmem %s3, %s202
      %s204 = smul.u32 32, %s19
      %p205 = scmp.lt.s32.totalorder %s18, 0
      %s206 = scalar_select %p205, %s18, 0
      %p207 = scmp.lt.s32.totalorder %s204, 63
      %s208 = scalar_select %p207, %s204, 63
      %s209 = smul.addr %s206, 64
      %s210 = sadd.s32 %s208, %s209
      %s211 = smul.addr %s210, 8
      %s212 = scalar_lea.vmem %s0, %s211
      %s213 = smul.u32 32, %s19
      %s214 = smul.u32 2, %s19
      %p215 = scmp.lt.s32.totalorder %s214, 3
      %s216 = scalar_select %p215, %s214, 3
      %s217 = scalar_lea.vmem %s2, %s216
      %s218 = smul.u32 2, %s19
      %s219 = smul.u32 2, %s19
      %p220 = scmp.lt.s32.totalorder %s18, 0
      %s221 = scalar_select %p220, %s18, 0
      %p222 = scmp.lt.s32.totalorder %s219, 3
      %s223 = scalar_select %p222, %s219, 3
      %s224 = smul.addr %s221, 4
      %s225 = sadd.s32 %s223, %s224
      %s226 = smul.addr %s225, 8
      %s227 = scalar_lea.vmem %s3, %s226
      %s228 = smul.u32 2, %s19
      %p229 = scmp.eq.s32.totalorder %s19, 0
      // Predicated region
      $region33: #{_istft_forward.1} parent=31 // pred_check
        %p230 = pneg %p229
      $region34: #{_istft_forward.1} parent=31 // pred_check_branch
        %232 = sbr.rel (%p230) target = $region36
      $region35: #{_istft_forward.1} parent=31 // pred_region
        %233 = vst [vmem:[#allocation3] sm:$0xff] 0.0
        %234 = vst [vmem:[#allocation3 + $0x8] sm:$0xff] 0.0
        %235 = vst [vmem:[#allocation3 + $0x10] sm:$0xff] 0.0
      $region36: #{_istft_forward.1} parent=31 // pred_fallthru
        _
      %v236 = vld [vmem:[%s212] sm:$0xff]
      %v237 = vld [vmem:[%s212 + $0x8] sm:$0xff]
      %v238 = vld [vmem:[%s212 + $0x10] sm:$0xff]
      %v239 = vld [vmem:[%s212 + $0x18] sm:$0xff]
      %v240 = vld [vmem:[%s212 + $0x20] sm:$0xff]
      %v241 = vld [vmem:[%s212 + $0x28] sm:$0xff]
      %v242 = vld [vmem:[%s212 + $0x30] sm:$0xff]
      %v243 = vld [vmem:[%s212 + $0x38] sm:$0xff]
      %v244 = vld [vmem:[%s212 + $0x40] sm:$0xff]
      %v245 = vld [vmem:[%s212 + $0x48] sm:$0xff]
      %v246 = vld [vmem:[%s212 + $0x50] sm:$0xff]
      %v247 = vld [vmem:[%s212 + $0x58] sm:$0xff]
      %v248 = vld [vmem:[%s212 + $0x60] sm:$0xff]
      %v249 = vld [vmem:[%s212 + $0x68] sm:$0xff]
      %v250 = vld [vmem:[%s212 + $0x70] sm:$0xff]
      %v251 = vld [vmem:[%s212 + $0x78] sm:$0xff]
      %v252 = vld [vmem:[%s212 + $0x80] sm:$0xff]
      %v253 = vld [vmem:[%s212 + $0x88] sm:$0xff]
      %v254 = vld [vmem:[%s212 + $0x90] sm:$0xff]
      %v255 = vld [vmem:[%s212 + $0x98] sm:$0xff]
      %v256 = vld [vmem:[%s212 + $0xa0] sm:$0xff]
      %v257 = vld [vmem:[%s212 + $0xa8] sm:$0xff]
      %v258 = vld [vmem:[%s212 + $0xb0] sm:$0xff]
      %v259 = vld [vmem:[%s212 + $0xb8] sm:$0xff]
      %v260 = vld [vmem:[%s212 + $0xc0] sm:$0xff]
      %v261 = vld [vmem:[%s212 + $0xc8] sm:$0xff]
      %v262 = vld [vmem:[%s212 + $0xd0] sm:$0xff]
      %v263 = vld [vmem:[%s212 + $0xd8] sm:$0xff]
      %v264 = vld [vmem:[%s212 + $0xe0] sm:$0xff]
      %v265 = vld [vmem:[%s212 + $0xe8] sm:$0xff]
      %v266 = vld [vmem:[%s212 + $0xf0] sm:$0xff]
      %v267 = vld [vmem:[%s212 + $0xf8] sm:$0xff]
      %v268 = vld [vmem:[%s1] sm:$0xff]
      %v269 = vld [vmem:[%s1 + $0x8] sm:$0xff]
      %v270 = vld [vmem:[%s1 + $0x10] sm:$0xff]
      %v271 = vld [vmem:[%s1 + $0x18] sm:$0xff]
      %v272 = vld [vmem:[%s1 + $0x20] sm:$0xff]
      %v273 = vld [vmem:[%s1 + $0x28] sm:$0xff]
      %v274 = vld [vmem:[%s1 + $0x30] sm:$0xff]
      %v275 = vld [vmem:[%s1 + $0x38] sm:$0xff]
      %v276 = vld [vmem:[%s1 + $0x40] sm:$0xff]
      %v277 = vld [vmem:[%s1 + $0x48] sm:$0xff]
      %v278 = vld [vmem:[%s1 + $0x50] sm:$0xff]
      %v279 = vld [vmem:[%s1 + $0x58] sm:$0xff]
      %v280 = vld [vmem:[%s1 + $0x60] sm:$0xff]
      %v281 = vld [vmem:[%s1 + $0x68] sm:$0xff]
      %v282 = vld [vmem:[%s1 + $0x70] sm:$0xff]
      %v283 = vld [vmem:[%s1 + $0x78] sm:$0xff]
      %284 = vmatprep.subr.mxu0 0.0
      %285 = vmatpush1.msra.mxu0 %v268
      %286 = vmatprep.subr.mxu0 0.0
      %287 = vmatpush1.msra.mxu0 %v269
      %288 = vmatprep.subr.mxu0 0.0
      %289 = vmatpush1.msra.mxu0 %v270
      %290 = vmatprep.subr.mxu0 0.0
      %291 = vmatpush1.msra.mxu0 %v271
      %292 = vmatprep.subr.mxu0 0.0
      %293 = vmatpush1.msra.mxu0 %v272
      %294 = vmatprep.subr.mxu0 0.0
      %295 = vmatpush1.msra.mxu0 %v273
      %296 = vmatprep.subr.mxu0 0.0
      %297 = vmatpush1.msra.mxu0 %v274
      %298 = vmatprep.subr.mxu0 0.0
      %299 = vmatpush1.msra.mxu0 %v275
      %300 = vmatprep.subr.mxu0 0.0
      %301 = vmatpush1.msra.mxu0 %v276
      %302 = vmatprep.subr.mxu0 0.0
      %303 = vmatpush1.msra.mxu0 %v277
      %304 = vmatprep.subr.mxu0 0.0
      %305 = vmatpush1.msra.mxu0 %v278
      %306 = vmatprep.subr.mxu0 0.0
      %307 = vmatpush1.msra.mxu0 %v279
      %308 = vmatprep.subr.mxu0 0.0
      %309 = vmatpush1.msra.mxu0 %v280
      %310 = vmatprep.subr.mxu0 0.0
      %311 = vmatpush1.msra.mxu0 %v281
      %312 = vmatprep.subr.mxu0 0.0
      %313 = vmatpush1.msra.mxu0 %v282
      %314 = vmatprep.subr.mxu0 0.0
      %315 = vmatpush1.msra.mxu0 %v283
      %316 = vmatprep.subr.mxu0 0.0
      %317 = vmatpush1.msra.mxu0 0.0
      %318 = vmatprep.subr.mxu0 0.0
      %319 = vmatpush1.msra.mxu0 0.0
      %320 = vmatprep.subr.mxu0 0.0
      %321 = vmatpush1.msra.mxu0 0.0
      %322 = vmatprep.subr.mxu0 0.0
      %323 = vmatpush1.msra.mxu0 0.0
      %324 = vmatprep.subr.mxu0 0.0
      %325 = vmatpush1.msra.mxu0 0.0
      %326 = vmatprep.subr.mxu0 0.0
      %327 = vmatpush1.msra.mxu0 0.0
      %328 = vmatprep.subr.mxu0 0.0
      %329 = vmatpush1.msra.mxu0 0.0
      %330 = vmatprep.subr.mxu0 0.0
      %331 = vmatpush1.msra.mxu0 0.0
      %332 = vmatprep.subr.mxu0 0.0
      %333 = vmatpush1.msra.mxu0 0.0
      %334 = vmatprep.subr.mxu0 0.0
      %335 = vmatpush1.msra.mxu0 0.0
      %336 = vmatprep.subr.mxu0 0.0
      %337 = vmatpush1.msra.mxu0 0.0
      %338 = vmatprep.subr.mxu0 0.0
      %339 = vmatpush1.msra.mxu0 0.0
      %340 = vmatprep.subr.mxu0 0.0
      %341 = vmatpush1.msra.mxu0 0.0
      %342 = vmatprep.subr.mxu0 0.0
      %343 = vmatpush1.msra.mxu0 0.0
      %344 = vmatprep.subr.mxu0 0.0
      %345 = vmatpush1.msra.mxu0 0.0
      %346 = vmatprep.subr.mxu0 0.0
      %347 = vmatpush1.msra.mxu0 0.0
      %348 = vmatprep.mubr.f32.mxu0 0.0
      %349 = vmatmul.mubr.f32.gmra.mrb[0].mxu0 %v236
      %v350 = vpop.f32.mrb[0].mxu0
      %v351 = vadd.f32 0.0, %v350
      %v352 = vpop.f32.mrb[0].mxu0
      %353 = vmatprep.mubr.f32.mxu0 0.0
      %354 = vmatmul.mubr.f32.gmra.mrb[0].mxu0 %v237
      %v355 = vpop.f32.mrb[0].mxu0
      %v356 = vadd.f32 0.0, %v355
      %v357 = vpop.f32.mrb[0].mxu0
      %358 = vmatprep.mubr.f32.mxu0 0.0
      %359 = vmatmul.mubr.f32.gmra.mrb[0].mxu0 %v238
      %v360 = vpop.f32.mrb[0].mxu0
      %v361 = vadd.f32 0.0, %v360
      %v362 = vpop.f32.mrb[0].mxu0
      %363 = vmatprep.mubr.f32.mxu0 0.0
      %364 = vmatmul.mubr.f32.gmra.mrb[0].mxu0 %v239
      %v365 = vpop.f32.mrb[0].mxu0
      %v366 = vadd.f32 0.0, %v365
      %v367 = vpop.f32.mrb[0].mxu0
      %368 = vmatprep.mubr.f32.mxu0 0.0
      %369 = vmatmul.mubr.f32.gmra.mrb[0].mxu0 %v240
      %v370 = vpop.f32.mrb[0].mxu0
      %v371 = vadd.f32 0.0, %v370
      %v372 = vpop.f32.mrb[0].mxu0
      %373 = vmatprep.mubr.f32.mxu0 0.0
      %374 = vmatmul.mubr.f32.gmra.mrb[0].mxu0 %v241
      %v375 = vpop.f32.mrb[0].mxu0
      %v376 = vadd.f32 0.0, %v375
      %v377 = vpop.f32.mrb[0].mxu0
      %378 = vmatprep.mubr.f32.mxu0 0.0
      %379 = vmatmul.mubr.f32.gmra.mrb[0].mxu0 %v242
      %v380 = vpop.f32.mrb[0].mxu0
      %v381 = vadd.f32 0.0, %v380
      %v382 = vpop.f32.mrb[0].mxu0
      %383 = vmatprep.mubr.f32.mxu0 0.0
      %384 = vmatmul.mubr.f32.gmra.mrb[0].mxu0 %v243
      %v385 = vpop.f32.mrb[0].mxu0
      %v386 = vadd.f32 0.0, %v385
      %v387 = vpop.f32.mrb[0].mxu0
      %388 = vmatprep.mubr.f32.mxu0 0.0
      %389 = vmatmul.mubr.f32.gmra.mrb[0].mxu0 %v244
      %v390 = vpop.f32.mrb[0].mxu0
      %v391 = vadd.f32 0.0, %v390
      %v392 = vpop.f32.mrb[0].mxu0
      %393 = vmatprep.mubr.f32.mxu0 0.0
      %394 = vmatmul.mubr.f32.gmra.mrb[0].mxu0 %v245
      %v395 = vpop.f32.mrb[0].mxu0
      %v396 = vadd.f32 0.0, %v395
      %v397 = vpop.f32.mrb[0].mxu0
      %398 = vmatprep.mubr.f32.mxu0 0.0
      %399 = vmatmul.mubr.f32.gmra.mrb[0].mxu0 %v246
      %v400 = vpop.f32.mrb[0].mxu0
      %v401 = vadd.f32 0.0, %v400
      %v402 = vpop.f32.mrb[0].mxu0
      %403 = vmatprep.mubr.f32.mxu0 0.0
      %404 = vmatmul.mubr.f32.gmra.mrb[0].mxu0 %v247
      %v405 = vpop.f32.mrb[0].mxu0
      %v406 = vadd.f32 0.0, %v405
      %v407 = vpop.f32.mrb[0].mxu0
      %408 = vmatprep.mubr.f32.mxu0 0.0
      %409 = vmatmul.mubr.f32.gmra.mrb[0].mxu0 %v248
      %v410 = vpop.f32.mrb[0].mxu0
      %v411 = vadd.f32 0.0, %v410
      %v412 = vpop.f32.mrb[0].mxu0
      %413 = vmatprep.mubr.f32.mxu0 0.0
      %414 = vmatmul.mubr.f32.gmra.mrb[0].mxu0 %v249
      %v415 = vpop.f32.mrb[0].mxu0
      %v416 = vadd.f32 0.0, %v415
      %v417 = vpop.f32.mrb[0].mxu0
      %418 = vmatprep.mubr.f32.mxu0 0.0
      %419 = vmatmul.mubr.f32.gmra.mrb[0].mxu0 %v250
      %v420 = vpop.f32.mrb[0].mxu0
      %v421 = vadd.f32 0.0, %v420
      %v422 = vpop.f32.mrb[0].mxu0
      %423 = vmatprep.mubr.f32.mxu0 0.0
      %424 = vmatmul.mubr.f32.gmra.mrb[0].mxu0 %v251
      %v425 = vpop.f32.mrb[0].mxu0
      %v426 = vadd.f32 0.0, %v425
      %v427 = vpop.f32.mrb[0].mxu0
      %428 = vmatprep.mubr.f32.mxu0 0.0
      %429 = vmatmul.mubr.f32.gmra.mrb[0].mxu0 %v252
      %v430 = vpop.f32.mrb[0].mxu0
      %v431 = vadd.f32 0.0, %v430
      %v432 = vpop.f32.mrb[0].mxu0
      %433 = vmatprep.mubr.f32.mxu0 0.0
      %434 = vmatmul.mubr.f32.gmra.mrb[0].mxu0 %v253
      %v435 = vpop.f32.mrb[0].mxu0
      %v436 = vadd.f32 0.0, %v435
      %v437 = vpop.f32.mrb[0].mxu0
      %438 = vmatprep.mubr.f32.mxu0 0.0
      %439 = vmatmul.mubr.f32.gmra.mrb[0].mxu0 %v254
      %v440 = vpop.f32.mrb[0].mxu0
      %v441 = vadd.f32 0.0, %v440
      %v442 = vpop.f32.mrb[0].mxu0
      %443 = vmatprep.mubr.f32.mxu0 0.0
      %444 = vmatmul.mubr.f32.gmra.mrb[0].mxu0 %v255
      %v445 = vpop.f32.mrb[0].mxu0
      %v446 = vadd.f32 0.0, %v445
      %v447 = vpop.f32.mrb[0].mxu0
      %448 = vmatprep.mubr.f32.mxu0 0.0
      %449 = vmatmul.mubr.f32.gmra.mrb[0].mxu0 %v256
      %v450 = vpop.f32.mrb[0].mxu0
      %v451 = vadd.f32 0.0, %v450
      %v452 = vpop.f32.mrb[0].mxu0
      %453 = vmatprep.mubr.f32.mxu0 0.0
      %454 = vmatmul.mubr.f32.gmra.mrb[0].mxu0 %v257
      %v455 = vpop.f32.mrb[0].mxu0
      %v456 = vadd.f32 0.0, %v455
      %v457 = vpop.f32.mrb[0].mxu0
      %458 = vmatprep.mubr.f32.mxu0 0.0
      %459 = vmatmul.mubr.f32.gmra.mrb[0].mxu0 %v258
      %v460 = vpop.f32.mrb[0].mxu0
      %v461 = vadd.f32 0.0, %v460
      %v462 = vpop.f32.mrb[0].mxu0
      %463 = vmatprep.mubr.f32.mxu0 0.0
      %464 = vmatmul.mubr.f32.gmra.mrb[0].mxu0 %v259
      %v465 = vpop.f32.mrb[0].mxu0
      %v466 = vadd.f32 0.0, %v465
      %v467 = vpop.f32.mrb[0].mxu0
      %468 = vmatprep.mubr.f32.mxu0 0.0
      %469 = vmatmul.mubr.f32.gmra.mrb[0].mxu0 %v260
      %v470 = vpop.f32.mrb[0].mxu0
      %v471 = vadd.f32 0.0, %v470
      %v472 = vpop.f32.mrb[0].mxu0
      %473 = vmatprep.mubr.f32.mxu0 0.0
      %474 = vmatmul.mubr.f32.gmra.mrb[0].mxu0 %v261
      %v475 = vpop.f32.mrb[0].mxu0
      %v476 = vadd.f32 0.0, %v475
      %v477 = vpop.f32.mrb[0].mxu0
      %478 = vmatprep.mubr.f32.mxu0 0.0
      %479 = vmatmul.mubr.f32.gmra.mrb[0].mxu0 %v262
      %v480 = vpop.f32.mrb[0].mxu0
      %v481 = vadd.f32 0.0, %v480
      %v482 = vpop.f32.mrb[0].mxu0
      %483 = vmatprep.mubr.f32.mxu0 0.0
      %484 = vmatmul.mubr.f32.gmra.mrb[0].mxu0 %v263
      %v485 = vpop.f32.mrb[0].mxu0
      %v486 = vadd.f32 0.0, %v485
      %v487 = vpop.f32.mrb[0].mxu0
      %488 = vmatprep.mubr.f32.mxu0 0.0
      %489 = vmatmul.mubr.f32.gmra.mrb[0].mxu0 %v264
      %v490 = vpop.f32.mrb[0].mxu0
      %v491 = vadd.f32 0.0, %v490
      %v492 = vpop.f32.mrb[0].mxu0
      %493 = vmatprep.mubr.f32.mxu0 0.0
      %494 = vmatmul.mubr.f32.gmra.mrb[0].mxu0 %v265
      %v495 = vpop.f32.mrb[0].mxu0
      %v496 = vadd.f32 0.0, %v495
      %v497 = vpop.f32.mrb[0].mxu0
      %498 = vmatprep.mubr.f32.mxu0 0.0
      %499 = vmatmul.mubr.f32.gmra.mrb[0].mxu0 %v266
      %v500 = vpop.f32.mrb[0].mxu0
      %v501 = vadd.f32 0.0, %v500
      %v502 = vpop.f32.mrb[0].mxu0
      %503 = vmatprep.mubr.f32.mxu0 0.0
      %504 = vmatmul.mubr.f32.gmra.mrb[0].mxu0 %v267
      %v505 = vpop.f32.mrb[0].mxu0
      %v506 = vadd.f32 0.0, %v505
      %v507 = vpop.f32.mrb[0].mxu0
      %508 = vdwg.mxu0
      %509 = vst [vmem:[#allocation2] sm:$0xff] %v351
      %510 = vst [vmem:[#allocation2 + $0x8] sm:$0xff] %v356
      %511 = vst [vmem:[#allocation2 + $0x10] sm:$0xff] %v361
      %512 = vst [vmem:[#allocation2 + $0x18] sm:$0xff] %v366
      %513 = vst [vmem:[#allocation2 + $0x20] sm:$0xff] %v371
      %514 = vst [vmem:[#allocation2 + $0x28] sm:$0xff] %v376
      %515 = vst [vmem:[#allocation2 + $0x30] sm:$0xff] %v381
      %516 = vst [vmem:[#allocation2 + $0x38] sm:$0xff] %v386
      %517 = vst [vmem:[#allocation2 + $0x40] sm:$0xff] %v391
      %518 = vst [vmem:[#allocation2 + $0x48] sm:$0xff] %v396
      %519 = vst [vmem:[#allocation2 + $0x50] sm:$0xff] %v401
      %520 = vst [vmem:[#allocation2 + $0x58] sm:$0xff] %v406
      %521 = vst [vmem:[#allocation2 + $0x60] sm:$0xff] %v411
      %522 = vst [vmem:[#allocation2 + $0x68] sm:$0xff] %v416
      %523 = vst [vmem:[#allocation2 + $0x70] sm:$0xff] %v421
      %524 = vst [vmem:[#allocation2 + $0x78] sm:$0xff] %v426
      %525 = vst [vmem:[#allocation2 + $0x80] sm:$0xff] %v431
      %526 = vst [vmem:[#allocation2 + $0x88] sm:$0xff] %v436
      %527 = vst [vmem:[#allocation2 + $0x90] sm:$0xff] %v441
      %528 = vst [vmem:[#allocation2 + $0x98] sm:$0xff] %v446
      %529 = vst [vmem:[#allocation2 + $0xa0] sm:$0xff] %v451
      %530 = vst [vmem:[#allocation2 + $0xa8] sm:$0xff] %v456
      %531 = vst [vmem:[#allocation2 + $0xb0] sm:$0xff] %v461
      %532 = vst [vmem:[#allocation2 + $0xb8] sm:$0xff] %v466
      %533 = vst [vmem:[#allocation2 + $0xc0] sm:$0xff] %v471
      %534 = vst [vmem:[#allocation2 + $0xc8] sm:$0xff] %v476
      %535 = vst [vmem:[#allocation2 + $0xd0] sm:$0xff] %v481
      %536 = vst [vmem:[#allocation2 + $0xd8] sm:$0xff] %v486
      %537 = vst [vmem:[#allocation2 + $0xe0] sm:$0xff] %v491
      %538 = vst [vmem:[#allocation2 + $0xe8] sm:$0xff] %v496
      %539 = vst [vmem:[#allocation2 + $0xf0] sm:$0xff] %v501
      %540 = vst [vmem:[#allocation2 + $0xf8] sm:$0xff] %v506
      %v541 = vld [vmem:[#allocation3] sm:$0xff]
      %v542 = vld [vmem:[#allocation2] sm:$0xff]
      %v543 = vadd.f32 %v541, %v542
      %544 = vst [vmem:[#allocation3] sm:$0xff] %v543
      %v545 = vld [vmem:[#allocation3] sm:$0xff]
      %v546 = vld [vmem:[#allocation3 + $0x8] sm:$0xff]
      %v547 = vld [vmem:[#allocation2 + $0x8] sm:$0xff]
      %549 = vrot.lane.b32.xlu0 %v547, 8
      %v550 = vpop.permute.xlu0 %549
      %v552 = vadd.f32 %v545, %v550
      %v553 = vadd.f32 %v546, %v550
      %vm554 = vcmask 1047616
      %555 = vst.msk [vmem:[#allocation3] sm:$0xff] %vm554, %v552
      %vm556 = vcmask 64512
      %557 = vst.msk [vmem:[#allocation3 + $0x8] sm:$0xff] %vm556, %v553
      %v558 = vld [vmem:[#allocation3] sm:$0xff]
      %v559 = vld [vmem:[#allocation3 + $0x8] sm:$0xff]
      %v560 = vld [vmem:[#allocation2 + $0x10] sm:$0xff]
      %562 = vrot.lane.b32.xlu0 %v560, 16
      %v563 = vpop.permute.xlu0 %562
      %v565 = vadd.f32 %v558, %v563
      %v566 = vadd.f32 %v559, %v563
      %vm567 = vcmask 1047680
      %568 = vst.msk [vmem:[#allocation3] sm:$0xff] %vm567, %v565
      %vm569 = vcmask 130048
      %570 = vst.msk [vmem:[#allocation3 + $0x8] sm:$0xff] %vm569, %v566
      %v571 = vld [vmem:[#allocation3] sm:$0xff]
      %v572 = vld [vmem:[#allocation3 + $0x8] sm:$0xff]
      %v573 = vld [vmem:[#allocation2 + $0x18] sm:$0xff]
      %575 = vrot.lane.b32.xlu0 %v573, 24
      %v576 = vpop.permute.xlu0 %575
      %v578 = vadd.f32 %v571, %v576
      %v579 = vadd.f32 %v572, %v576
      %vm580 = vcmask 1047744
      %581 = vst.msk [vmem:[#allocation3] sm:$0xff] %vm580, %v578
      %vm582 = vcmask 195584
      %583 = vst.msk [vmem:[#allocation3 + $0x8] sm:$0xff] %vm582, %v579
      %v584 = vld [vmem:[#allocation3] sm:$0xff]
      %v585 = vld [vmem:[#allocation3 + $0x8] sm:$0xff]
      %v586 = vld [vmem:[#allocation2 + $0x20] sm:$0xff]
      %588 = vrot.lane.b32.xlu0 %v586, 32
      %v589 = vpop.permute.xlu0 %588
      %v591 = vadd.f32 %v584, %v589
      %v592 = vadd.f32 %v585, %v589
      %vm593 = vcmask 1047808
      %594 = vst.msk [vmem:[#allocation3] sm:$0xff] %vm593, %v591
      %vm595 = vcmask 261120
      %596 = vst.msk [vmem:[#allocation3 + $0x8] sm:$0xff] %vm595, %v592
      %v597 = vld [vmem:[#allocation3] sm:$0xff]
      %v598 = vld [vmem:[#allocation3 + $0x8] sm:$0xff]
      %v599 = vld [vmem:[#allocation2 + $0x28] sm:$0xff]
      %601 = vrot.lane.b32.xlu0 %v599, 40
      %v602 = vpop.permute.xlu0 %601
      %v604 = vadd.f32 %v597, %v602
      %v605 = vadd.f32 %v598, %v602
      %vm606 = vcmask 1047872
      %607 = vst.msk [vmem:[#allocation3] sm:$0xff] %vm606, %v604
      %vm608 = vcmask 326656
      %609 = vst.msk [vmem:[#allocation3 + $0x8] sm:$0xff] %vm608, %v605
      %v610 = vld [vmem:[#allocation3] sm:$0xff]
      %v611 = vld [vmem:[#allocation3 + $0x8] sm:$0xff]
      %v612 = vld [vmem:[#allocation2 + $0x30] sm:$0xff]
      %614 = vrot.lane.b32.xlu0 %v612, 48
      %v615 = vpop.permute.xlu0 %614
      %v617 = vadd.f32 %v610, %v615
      %v618 = vadd.f32 %v611, %v615
      %vm619 = vcmask 1047936
      %620 = vst.msk [vmem:[#allocation3] sm:$0xff] %vm619, %v617
      %vm621 = vcmask 392192
      %622 = vst.msk [vmem:[#allocation3 + $0x8] sm:$0xff] %vm621, %v618
      %v623 = vld [vmem:[#allocation3] sm:$0xff]
      %v624 = vld [vmem:[#allocation3 + $0x8] sm:$0xff]
      %v625 = vld [vmem:[#allocation2 + $0x38] sm:$0xff]
      %627 = vrot.lane.b32.xlu0 %v625, 56
      %v628 = vpop.permute.xlu0 %627
      %v630 = vadd.f32 %v623, %v628
      %v631 = vadd.f32 %v624, %v628
      %vm632 = vcmask 1048000
      %633 = vst.msk [vmem:[#allocation3] sm:$0xff] %vm632, %v630
      %vm634 = vcmask 457728
      %635 = vst.msk [vmem:[#allocation3 + $0x8] sm:$0xff] %vm634, %v631
      %v636 = vld [vmem:[#allocation3] sm:$0xff]
      %v637 = vld [vmem:[#allocation3 + $0x8] sm:$0xff]
      %v638 = vld [vmem:[#allocation2 + $0x40] sm:$0xff]
      %640 = vrot.lane.b32.xlu0 %v638, 64
      %v641 = vpop.permute.xlu0 %640
      %v643 = vadd.f32 %v636, %v641
      %v644 = vadd.f32 %v637, %v641
      %vm645 = vcmask 1048064
      %646 = vst.msk [vmem:[#allocation3] sm:$0xff] %vm645, %v643
      %vm647 = vcmask 523264
      %648 = vst.msk [vmem:[#allocation3 + $0x8] sm:$0xff] %vm647, %v644
      %v649 = vld [vmem:[#allocation3] sm:$0xff]
      %v650 = vld [vmem:[#allocation3 + $0x8] sm:$0xff]
      %v651 = vld [vmem:[#allocation2 + $0x48] sm:$0xff]
      %653 = vrot.lane.b32.xlu0 %v651, 72
      %v654 = vpop.permute.xlu0 %653
      %v656 = vadd.f32 %v649, %v654
      %v657 = vadd.f32 %v650, %v654
      %vm658 = vcmask 1048128
      %659 = vst.msk [vmem:[#allocation3] sm:$0xff] %vm658, %v656
      %vm660 = vcmask 588800
      %661 = vst.msk [vmem:[#allocation3 + $0x8] sm:$0xff] %vm660, %v657
      %v662 = vld [vmem:[#allocation3] sm:$0xff]
      %v663 = vld [vmem:[#allocation3 + $0x8] sm:$0xff]
      %v664 = vld [vmem:[#allocation2 + $0x50] sm:$0xff]
      %666 = vrot.lane.b32.xlu0 %v664, 80
      %v667 = vpop.permute.xlu0 %666
      %v669 = vadd.f32 %v662, %v667
      %v670 = vadd.f32 %v663, %v667
      %vm671 = vcmask 1048192
      %672 = vst.msk [vmem:[#allocation3] sm:$0xff] %vm671, %v669
      %vm673 = vcmask 654336
      %674 = vst.msk [vmem:[#allocation3 + $0x8] sm:$0xff] %vm673, %v670
      %v675 = vld [vmem:[#allocation3] sm:$0xff]
      %v676 = vld [vmem:[#allocation3 + $0x8] sm:$0xff]
      %v677 = vld [vmem:[#allocation2 + $0x58] sm:$0xff]
      %679 = vrot.lane.b32.xlu0 %v677, 88
      %v680 = vpop.permute.xlu0 %679
      %v682 = vadd.f32 %v675, %v680
      %v683 = vadd.f32 %v676, %v680
      %vm684 = vcmask 1048256
      %685 = vst.msk [vmem:[#allocation3] sm:$0xff] %vm684, %v682
      %vm686 = vcmask 719872
      %687 = vst.msk [vmem:[#allocation3 + $0x8] sm:$0xff] %vm686, %v683
      %v688 = vld [vmem:[#allocation3] sm:$0xff]
      %v689 = vld [vmem:[#allocation3 + $0x8] sm:$0xff]
      %v690 = vld [vmem:[#allocation2 + $0x60] sm:$0xff]
      %692 = vrot.lane.b32.xlu0 %v690, 96
      %v693 = vpop.permute.xlu0 %692
      %v695 = vadd.f32 %v688, %v693
      %v696 = vadd.f32 %v689, %v693
      %vm697 = vcmask 1048320
      %698 = vst.msk [vmem:[#allocation3] sm:$0xff] %vm697, %v695
      %vm699 = vcmask 785408
      %700 = vst.msk [vmem:[#allocation3 + $0x8] sm:$0xff] %vm699, %v696
      %v701 = vld [vmem:[#allocation3] sm:$0xff]
      %v702 = vld [vmem:[#allocation3 + $0x8] sm:$0xff]
      %v703 = vld [vmem:[#allocation2 + $0x68] sm:$0xff]
      %705 = vrot.lane.b32.xlu0 %v703, 104
      %v706 = vpop.permute.xlu0 %705
      %v708 = vadd.f32 %v701, %v706
      %v709 = vadd.f32 %v702, %v706
      %vm710 = vcmask 1048384
      %711 = vst.msk [vmem:[#allocation3] sm:$0xff] %vm710, %v708
      %vm712 = vcmask 850944
      %713 = vst.msk [vmem:[#allocation3 + $0x8] sm:$0xff] %vm712, %v709
      %v714 = vld [vmem:[#allocation3] sm:$0xff]
      %v715 = vld [vmem:[#allocation3 + $0x8] sm:$0xff]
      %v716 = vld [vmem:[#allocation2 + $0x70] sm:$0xff]
      %718 = vrot.lane.b32.xlu0 %v716, 112
      %v719 = vpop.permute.xlu0 %718
      %v721 = vadd.f32 %v714, %v719
      %v722 = vadd.f32 %v715, %v719
      %vm723 = vcmask 1048448
      %724 = vst.msk [vmem:[#allocation3] sm:$0xff] %vm723, %v721
      %vm725 = vcmask 916480
      %726 = vst.msk [vmem:[#allocation3 + $0x8] sm:$0xff] %vm725, %v722
      %v727 = vld [vmem:[#allocation3] sm:$0xff]
      %v728 = vld [vmem:[#allocation3 + $0x8] sm:$0xff]
      %v729 = vld [vmem:[#allocation2 + $0x78] sm:$0xff]
      %731 = vrot.lane.b32.xlu0 %v729, 120
      %v732 = vpop.permute.xlu0 %731
      %v734 = vadd.f32 %v727, %v732
      %v735 = vadd.f32 %v728, %v732
      %vm736 = vcmask 1048512
      %737 = vst.msk [vmem:[#allocation3] sm:$0xff] %vm736, %v734
      %vm738 = vcmask 982016
      %739 = vst.msk [vmem:[#allocation3 + $0x8] sm:$0xff] %vm738, %v735
      %v740 = vld [vmem:[#allocation3 + $0x8] sm:$0xff]
      %v741 = vld [vmem:[#allocation2 + $0x80] sm:$0xff]
      %v742 = vadd.f32 %v740, %v741
      %743 = vst [vmem:[#allocation3 + $0x8] sm:$0xff] %v742
      %v744 = vld [vmem:[#allocation3 + $0x8] sm:$0xff]
      %v745 = vld [vmem:[#allocation3 + $0x10] sm:$0xff]
      %v746 = vld [vmem:[#allocation2 + $0x88] sm:$0xff]
      %748 = vrot.lane.b32.xlu0 %v746, 8
      %v749 = vpop.permute.xlu0 %748
      %v751 = vadd.f32 %v744, %v749
      %v752 = vadd.f32 %v745, %v749
      %753 = vst.msk [vmem:[#allocation3 + $0x8] sm:$0xff] %vm554, %v751
      %754 = vst.msk [vmem:[#allocation3 + $0x10] sm:$0xff] %vm556, %v752
      %v755 = vld [vmem:[#allocation3 + $0x8] sm:$0xff]
      %v756 = vld [vmem:[#allocation3 + $0x10] sm:$0xff]
      %v757 = vld [vmem:[#allocation2 + $0x90] sm:$0xff]
      %759 = vrot.lane.b32.xlu0 %v757, 16
      %v760 = vpop.permute.xlu0 %759
      %v762 = vadd.f32 %v755, %v760
      %v763 = vadd.f32 %v756, %v760
      %764 = vst.msk [vmem:[#allocation3 + $0x8] sm:$0xff] %vm567, %v762
      %765 = vst.msk [vmem:[#allocation3 + $0x10] sm:$0xff] %vm569, %v763
      %v766 = vld [vmem:[#allocation3 + $0x8] sm:$0xff]
      %v767 = vld [vmem:[#allocation3 + $0x10] sm:$0xff]
      %v768 = vld [vmem:[#allocation2 + $0x98] sm:$0xff]
      %770 = vrot.lane.b32.xlu0 %v768, 24
      %v771 = vpop.permute.xlu0 %770
      %v773 = vadd.f32 %v766, %v771
      %v774 = vadd.f32 %v767, %v771
      %775 = vst.msk [vmem:[#allocation3 + $0x8] sm:$0xff] %vm580, %v773
      %776 = vst.msk [vmem:[#allocation3 + $0x10] sm:$0xff] %vm582, %v774
      %v777 = vld [vmem:[#allocation3 + $0x8] sm:$0xff]
      %v778 = vld [vmem:[#allocation3 + $0x10] sm:$0xff]
      %v779 = vld [vmem:[#allocation2 + $0xa0] sm:$0xff]
      %781 = vrot.lane.b32.xlu0 %v779, 32
      %v782 = vpop.permute.xlu0 %781
      %v784 = vadd.f32 %v777, %v782
      %v785 = vadd.f32 %v778, %v782
      %786 = vst.msk [vmem:[#allocation3 + $0x8] sm:$0xff] %vm593, %v784
      %787 = vst.msk [vmem:[#allocation3 + $0x10] sm:$0xff] %vm595, %v785
      %v788 = vld [vmem:[#allocation3 + $0x8] sm:$0xff]
      %v789 = vld [vmem:[#allocation3 + $0x10] sm:$0xff]
      %v790 = vld [vmem:[#allocation2 + $0xa8] sm:$0xff]
      %792 = vrot.lane.b32.xlu0 %v790, 40
      %v793 = vpop.permute.xlu0 %792
      %v795 = vadd.f32 %v788, %v793
      %v796 = vadd.f32 %v789, %v793
      %797 = vst.msk [vmem:[#allocation3 + $0x8] sm:$0xff] %vm606, %v795
      %798 = vst.msk [vmem:[#allocation3 + $0x10] sm:$0xff] %vm608, %v796
      %v799 = vld [vmem:[#allocation3 + $0x8] sm:$0xff]
      %v800 = vld [vmem:[#allocation3 + $0x10] sm:$0xff]
      %v801 = vld [vmem:[#allocation2 + $0xb0] sm:$0xff]
      %803 = vrot.lane.b32.xlu0 %v801, 48
      %v804 = vpop.permute.xlu0 %803
      %v806 = vadd.f32 %v799, %v804
      %v807 = vadd.f32 %v800, %v804
      %808 = vst.msk [vmem:[#allocation3 + $0x8] sm:$0xff] %vm619, %v806
      %809 = vst.msk [vmem:[#allocation3 + $0x10] sm:$0xff] %vm621, %v807
      %v810 = vld [vmem:[#allocation3 + $0x8] sm:$0xff]
      %v811 = vld [vmem:[#allocation3 + $0x10] sm:$0xff]
      %v812 = vld [vmem:[#allocation2 + $0xb8] sm:$0xff]
      %814 = vrot.lane.b32.xlu0 %v812, 56
      %v815 = vpop.permute.xlu0 %814
      %v817 = vadd.f32 %v810, %v815
      %v818 = vadd.f32 %v811, %v815
      %819 = vst.msk [vmem:[#allocation3 + $0x8] sm:$0xff] %vm632, %v817
      %820 = vst.msk [vmem:[#allocation3 + $0x10] sm:$0xff] %vm634, %v818
      %v821 = vld [vmem:[#allocation3 + $0x8] sm:$0xff]
      %v822 = vld [vmem:[#allocation3 + $0x10] sm:$0xff]
      %v823 = vld [vmem:[#allocation2 + $0xc0] sm:$0xff]
      %825 = vrot.lane.b32.xlu0 %v823, 64
      %v826 = vpop.permute.xlu0 %825
      %v828 = vadd.f32 %v821, %v826
      %v829 = vadd.f32 %v822, %v826
      %830 = vst.msk [vmem:[#allocation3 + $0x8] sm:$0xff] %vm645, %v828
      %831 = vst.msk [vmem:[#allocation3 + $0x10] sm:$0xff] %vm647, %v829
      %v832 = vld [vmem:[#allocation3 + $0x8] sm:$0xff]
      %v833 = vld [vmem:[#allocation3 + $0x10] sm:$0xff]
      %v834 = vld [vmem:[#allocation2 + $0xc8] sm:$0xff]
      %836 = vrot.lane.b32.xlu0 %v834, 72
      %v837 = vpop.permute.xlu0 %836
      %v839 = vadd.f32 %v832, %v837
      %v840 = vadd.f32 %v833, %v837
      %841 = vst.msk [vmem:[#allocation3 + $0x8] sm:$0xff] %vm658, %v839
      %842 = vst.msk [vmem:[#allocation3 + $0x10] sm:$0xff] %vm660, %v840
      %v843 = vld [vmem:[#allocation3 + $0x8] sm:$0xff]
      %v844 = vld [vmem:[#allocation3 + $0x10] sm:$0xff]
      %v845 = vld [vmem:[#allocation2 + $0xd0] sm:$0xff]
      %847 = vrot.lane.b32.xlu0 %v845, 80
      %v848 = vpop.permute.xlu0 %847
      %v850 = vadd.f32 %v843, %v848
      %v851 = vadd.f32 %v844, %v848
      %852 = vst.msk [vmem:[#allocation3 + $0x8] sm:$0xff] %vm671, %v850
      %853 = vst.msk [vmem:[#allocation3 + $0x10] sm:$0xff] %vm673, %v851
      %v854 = vld [vmem:[#allocation3 + $0x8] sm:$0xff]
      %v855 = vld [vmem:[#allocation3 + $0x10] sm:$0xff]
      %v856 = vld [vmem:[#allocation2 + $0xd8] sm:$0xff]
      %858 = vrot.lane.b32.xlu0 %v856, 88
      %v859 = vpop.permute.xlu0 %858
      %v861 = vadd.f32 %v854, %v859
      %v862 = vadd.f32 %v855, %v859
      %863 = vst.msk [vmem:[#allocation3 + $0x8] sm:$0xff] %vm684, %v861
      %864 = vst.msk [vmem:[#allocation3 + $0x10] sm:$0xff] %vm686, %v862
      %v865 = vld [vmem:[#allocation3 + $0x8] sm:$0xff]
      %v866 = vld [vmem:[#allocation3 + $0x10] sm:$0xff]
      %v867 = vld [vmem:[#allocation2 + $0xe0] sm:$0xff]
      %869 = vrot.lane.b32.xlu0 %v867, 96
      %v870 = vpop.permute.xlu0 %869
      %v872 = vadd.f32 %v865, %v870
      %v873 = vadd.f32 %v866, %v870
      %874 = vst.msk [vmem:[#allocation3 + $0x8] sm:$0xff] %vm697, %v872
      %875 = vst.msk [vmem:[#allocation3 + $0x10] sm:$0xff] %vm699, %v873
      %v876 = vld [vmem:[#allocation3 + $0x8] sm:$0xff]
      %v877 = vld [vmem:[#allocation3 + $0x10] sm:$0xff]
      %v878 = vld [vmem:[#allocation2 + $0xe8] sm:$0xff]
      %880 = vrot.lane.b32.xlu0 %v878, 104
      %v881 = vpop.permute.xlu0 %880
      %v883 = vadd.f32 %v876, %v881
      %v884 = vadd.f32 %v877, %v881
      %885 = vst.msk [vmem:[#allocation3 + $0x8] sm:$0xff] %vm710, %v883
      %886 = vst.msk [vmem:[#allocation3 + $0x10] sm:$0xff] %vm712, %v884
      %v887 = vld [vmem:[#allocation3 + $0x8] sm:$0xff]
      %v888 = vld [vmem:[#allocation3 + $0x10] sm:$0xff]
      %v889 = vld [vmem:[#allocation2 + $0xf0] sm:$0xff]
      %891 = vrot.lane.b32.xlu0 %v889, 112
      %v892 = vpop.permute.xlu0 %891
      %v894 = vadd.f32 %v887, %v892
      %v895 = vadd.f32 %v888, %v892
      %896 = vst.msk [vmem:[#allocation3 + $0x8] sm:$0xff] %vm723, %v894
      %897 = vst.msk [vmem:[#allocation3 + $0x10] sm:$0xff] %vm725, %v895
      %v898 = vld [vmem:[#allocation3 + $0x8] sm:$0xff]
      %v899 = vld [vmem:[#allocation3 + $0x10] sm:$0xff]
      %v900 = vld [vmem:[#allocation2 + $0xf8] sm:$0xff]
      %902 = vrot.lane.b32.xlu0 %v900, 120
      %v903 = vpop.permute.xlu0 %902
      %v905 = vadd.f32 %v898, %v903
      %v906 = vadd.f32 %v899, %v903
      %907 = vst.msk [vmem:[#allocation3 + $0x8] sm:$0xff] %vm736, %v905
      %908 = vst.msk [vmem:[#allocation3 + $0x10] sm:$0xff] %vm738, %v906
      %v909 = vld [vmem:[#allocation3] sm:$0xff]
      %v910 = vld [vmem:[#allocation3 + $0x8] sm:$0xff]
      %v911 = vld [vmem:[%s217] sm:$0x3]
      %v913 = vlaneseq
      %v914 = vshrl.u32 %v913, 7
      %v915 = vsub.s32 0, %v914
      %v916 = vrot.slane %v911, %v915
      %v917 = vlaneseq
      %v918 = vshrl.u32 %v917, 7
      %v919 = vsub.s32 1, %v918
      %v920 = vrot.slane %v911, %v919
      %v923 = vmul.f32 %v909, %v916
      %v924 = vmul.f32 %v910, %v920
      %925 = vst [vmem:[%s227] sm:$0xff] %v923
      %926 = vst [vmem:[%s227 + $0x8] sm:$0xff] %v924
      %v927 = vld [vmem:[#allocation3 + $0x10] sm:$0xff]
      %928 = vst [vmem:[#allocation3] sm:$0xff] %v927
      %929 = vst [vmem:[#allocation3 + $0x8] sm:$0xff] 0.0
      %930 = vst [vmem:[#allocation3 + $0x10] sm:$0xff] 0.0
      %s931 = smul.u32 2, %s19
      %p932 = scmp.lt.s32.totalorder %s18, 0
      %s933 = scalar_select %p932, %s18, 0
      %p934 = scmp.lt.s32.totalorder %s931, 3
      %s935 = scalar_select %p934, %s931, 3
      %s936 = smul.addr %s933, 4
      %s937 = sadd.s32 %s935, %s936
      %s938 = smul.addr %s937, 8
      %s939 = scalar_lea.vmem %s3, %s938
      // Predicated region
      $region37: #{_istft_forward.1} parent=31 // pred_check
        %p940 = pneg %p121
      $region38: #{_istft_forward.1} parent=31 // pred_check_branch
        %942 = sbr.rel (%p940) target = $region40
      $region39: #{_istft_forward.1} parent=31 // pred_region
        %s943 = smul.u32 2, %s19
      $region40: #{_istft_forward.1} parent=31 // pred_fallthru
        _
    $region32: #{_istft_forward.1} parent=5 // pred_fallthru
      _
    %p944 = scmp.le.s32.totalorder 2, %s9
    // Predicated region
    $region41: #{_istft_forward.1} parent=5 // pred_check
      %p945 = pneg %p944
    $region42: #{_istft_forward.1} parent=5 // pred_check_branch
      %947 = sbr.rel (%p945) target = $region44
    $region43: #{_istft_forward.1} parent=5 // pred_region
      %s948 = ssub.s32 %s9, 2
      // Predicated region
      $region45: #{_istft_forward.1} parent=43 // pred_check
        %p949 = pneg %p127
      $region46: #{_istft_forward.1} parent=43 // pred_check_branch
        %951 = sbr.rel (%p949) target = $region48
      $region47: #{_istft_forward.1} parent=43 // pred_region
        %s952 = smul.u32 2, %s21
        %p953 = scmp.lt.s32.totalorder %s20, 0
        %s954 = scalar_select %p953, %s20, 0
        %p955 = scmp.lt.s32.totalorder %s952, 3
        %s956 = scalar_select %p955, %s952, 3
        %s957 = smul.addr %s954, 4
        %s958 = sadd.s32 %s956, %s957
        %s959 = smul.addr %s958, 8
        %s960 = scalar_lea.vmem %s3, %s959
      $region48: #{_istft_forward.1} parent=43 // pred_fallthru
        _
    $region44: #{_istft_forward.1} parent=5 // pred_fallthru
      _
  $region6: #{_istft_forward.1} parent=0 // loop_footer
    %s13 = sadd.s32 1, %s9
  $region7: #{_istft_forward.1} parent=0 // loop_footer_branch
    %8 = sbr.rel target = $region3
  $region8: #{_istft_forward.1} parent=0 // loop_exit
    _

</llo_original>
